<compile_context>
chip_gen: v6e
topology: v6e:2x2x1
jax: 0.10.0
libtpu: 0.0.40
codegen_flags: <defaults>
</compile_context>

<pallas_src>
import functools
import math

import jax
import jax.numpy as jnp
from jax import lax
from jax.experimental import pallas as pl
from jax.experimental.pallas import tpu as pltpu


def _round_up(x, m):
    return ((x + m - 1) // m) * m


# ----------------------------- Pallas kernel --------------------------------
def _sft_head_kernel(x_ref, kv_ref, wq_ref, wo_ref, ffn_ref, vec_ref, grp_ref,
                     lm_ref, out_ref, y_ref, *, hidden, acc_dtype):
    """Fused: Q proj -> grouped softmax attention over pre-projected mission KV ->
    WO + residual -> LayerNorm -> FFN + residual -> LayerNorm (at j==0, into VMEM
    scratch) -> V-tiled lm_head matmul every grid step.

    Large matmuls take bf16 operands (native MXU dtype); Q / qkv are emitted
    directly in bf16 (acc_dtype) so no f32 intermediate is materialized; residual /
    softmax normalization / LayerNorm math stays in f32.
    """
    f32 = jnp.float32
    bf16 = jnp.bfloat16

    @pl.when(pl.program_id(1) == 0)
    def _attn_ffn_ln():
        x_bf = x_ref[...]                       # single load; bf16 [tn, Hpad]
        x = x_bf.astype(f32)                    # f32 residual path
        KV = kv_ref[...]                        # bf16 [CT, 12H] (precomputed on host)

        # Q = x @ (WQ^T / sqrt(H))  -- attention scale pre-folded into the weight.
        # emitted directly in bf16 (astype is a no-op when acc_dtype == bf16).
        Q = jnp.dot(x_bf, wq_ref[...], preferred_element_type=acc_dtype).astype(bf16)

        # qk = Q @ KV^T  (scale already folded into WQ)
        qk = lax.dot_general(Q, KV, (((1,), (1,)), ((), ())),
                             preferred_element_type=f32)            # [tn, CT]

        # grouped softmax over the T texts of each of the C classes. Columns are laid
        # out [c0t0..c0t(T-1), c1t0, ...]; per-group sums come from one bf16 matmul with
        # the precomputed block-diagonal ones mask grp_ref (0/1 is exact in bf16).
        # TODO(synk): row-global max (per-group constant cancels exactly); switch to a
        # per-group (per-class) max before shipping if real-model logit magnitudes could
        # underflow a whole class (denom -> 0 -> inf with the approx reciprocal).
        m = jnp.max(qk, axis=-1, keepdims=True)
        e = jnp.exp(qk - m)                                          # [tn, CT] f32
        denom = jnp.dot(e.astype(bf16), grp_ref[...],
                        preferred_element_type=f32)                  # [tn, CT]
        s = e * pl.reciprocal(denom, approx=True)                    # EUP reciprocal

        # attention readout, emitted directly in bf16
        qkv = jnp.dot(s.astype(bf16), KV,
                      preferred_element_type=acc_dtype).astype(bf16)  # [tn, 12H]

        wo_b, ffn_b = vec_ref[0:1, :], vec_ref[1:2, :]
        gamma, beta = vec_ref[2:3, :], vec_ref[3:4, :]
        inv_h = 1.0 / hidden

        def layer_norm(z):
            # sums span the zero-padded lane dim; divide by the true H so padding is
            # exact. gamma/beta are zero on padded lanes -> padded lanes stay 0.
            mu = jnp.sum(z, axis=-1, keepdims=True) * inv_h
            var = jnp.sum(z * z, axis=-1, keepdims=True) * inv_h - mu * mu
            return (z - mu) * lax.rsqrt(var + 1e-5) * gamma + beta

        y = jnp.dot(qkv, wo_ref[...], preferred_element_type=f32) + wo_b + x
        y = layer_norm(y)
        y = jnp.dot(y.astype(bf16), ffn_ref[...], preferred_element_type=f32) + ffn_b + y
        y = layer_norm(y)
        y_ref[...] = y.astype(bf16)             # persists across the V-tile grid axis

    # lm_head tile: [tn, Hpad] @ [Hpad, tile_v] -> lane-dense (Vpad multiple of 128).
    out_ref[...] = jnp.dot(y_ref[...], lm_ref[...],
                           preferred_element_type=jnp.float32).astype(out_ref.dtype)


# ----------------------- one-time host-side preprocessing --------------------
def prepare_kernel_params(p, mission_flat, *, H, C, T, V):
    """bf16 weight casts, attention-scale fold into WQ, KV projection hoisted out of
    the kernel, lane padding of H and V to multiples of 128, packing of the four
    small [1,H] vectors into one sublane-padded block, and the grouped-softmax
    block-diagonal mask (bf16)."""
    bf16, f32 = jnp.bfloat16, jnp.float32
    CT = C * T
    h_pad = _round_up(H, 128)
    v_pad = _round_up(V, 128)
    hh = 12 * H

    # KV = mission @ WKV^T depends only on constants -> precompute once (bf16).
    kv = jnp.dot(mission_flat.astype(bf16), p["wkv_t"].astype(bf16),
                 preferred_element_type=f32).astype(bf16)            # [CT, 12H]

    # block-diagonal ones mask for per-group softmax sums (0/1 exact in bf16).
    gid = jnp.arange(CT, dtype=jnp.int32) // T
    grp = (gid[:, None] == gid[None, :]).astype(bf16)                # [CT, CT]

    # lane-pad H -> h_pad with zeros. Padded lanes stay exactly 0 through the whole
    # pipeline (zero weight rows/cols, zero biases, zero gamma/beta on the pad).
    wq = jnp.zeros((h_pad, hh), bf16).at[:H, :].set(
        (p["wq_t"] * (1.0 / math.sqrt(H))).astype(bf16))             # 1/sqrt(H) folded
    wo = jnp.zeros((hh, h_pad), bf16).at[:, :H].set(p["wo_t"].astype(bf16))
    ffn = jnp.zeros((h_pad, h_pad), bf16).at[:H, :H].set(p["ffn_t"].astype(bf16))
    lm = jnp.zeros((h_pad, v_pad), bf16).at[:H, :V].set(p["lm_t"].astype(bf16))

    vecs = jnp.zeros((8, h_pad), f32)                                # sublane-padded pack
    vecs = vecs.at[0, :H].set(p["wo_b"][0])
    vecs = vecs.at[1, :H].set(p["ffn_b"][0])
    vecs = vecs.at[2, :H].set(p["ln_g"][0])
    vecs = vecs.at[3, :H].set(p["ln_b"][0])

    return {"kv": kv, "wq": wq, "wo": wo, "ffn": ffn, "lm": lm, "vecs": vecs,
            "grp": grp, "h_pad": h_pad, "v_pad": v_pad, "hidden": H}


def sft_head(x_bf, kp, *, tile_n=256, tile_v=2048, dot_out_dtype=jnp.bfloat16,
             out_dtype=jnp.float32, vmem_limit_mb=48):
    """x_bf: [N, H] bf16 hidden states (backbone is bf16). Returns PADDED logits
    [N, Vpad] -- padded vocab slots are exact 0; slice/mask at the consumer to avoid
    an extra HBM copy here.

    Tile guidance: tile_n=128 on v5e, 256 on v6e/v7x; tile_v<=2048 and
    vmem_limit_mb<=48 on v7x (64 MiB VMEM), tile_v up to 4096 / vmem_limit_mb up to
    ~96 on v6e (128 MiB VMEM). logits can be emitted bf16 (out_dtype) to halve
    writeback if the loss path tolerates it."""
    N, H = x_bf.shape
    h_pad, v_pad = kp["h_pad"], kp["v_pad"]
    hh = kp["wq"].shape[1]
    CT = kp["kv"].shape[0]

    x_p = x_bf if H == h_pad else jnp.zeros((N, h_pad), jnp.bfloat16).at[:, :H].set(x_bf)

    tn = min(tile_n, N)
    tv = min(tile_v, v_pad)
    assert N % tn == 0 and v_pad % tv == 0, "row / vocab tiles must divide the padded sizes"
    grid = (N // tn, v_pad // tv)

    kernel = functools.partial(_sft_head_kernel, hidden=kp["hidden"],
                               acc_dtype=dot_out_dtype)
    const = lambda shape: pl.BlockSpec(shape, lambda i, j: (0, 0))   # weights stay resident

    out = pl.pallas_call(
        kernel,
        out_shape=jax.ShapeDtypeStruct((N, v_pad), out_dtype),
        grid_spec=pltpu.PrefetchScalarGridSpec(
            num_scalar_prefetch=0,
            grid=grid,
            in_specs=[
                pl.BlockSpec((tn, h_pad), lambda i, j: (i, 0)),      # x, row-tiled
                const((CT, hh)),                                     # pre-projected KV
                const((h_pad, hh)),                                  # WQ (scale folded)
                const((hh, h_pad)),                                  # WO
                const((h_pad, h_pad)),                               # FFN
                const((8, h_pad)),                                   # packed biases / LN vecs
                const((CT, CT)),                                     # bf16 group mask
                pl.BlockSpec((h_pad, tv), lambda i, j: (0, j)),      # lm_head, V-tiled
            ],
            out_specs=pl.BlockSpec((tn, tv), lambda i, j: (i, j)),
            scratch_shapes=[pltpu.VMEM((tn, h_pad), jnp.bfloat16)],  # y, reused across V tiles
        ),
        compiler_params=pltpu.CompilerParams(
            dimension_semantics=("parallel", "arbitrary"),
            vmem_limit_bytes=vmem_limit_mb * 1024 * 1024,
        ),
    )(x_p, kp["kv"], kp["wq"], kp["wo"], kp["ffn"], kp["vecs"], kp["grp"], kp["lm"])
    return out


# ------------------------------ reference (pure JAX) -------------------------
def sft_head_ref(x, mission_bf, p, *, H, C, T):
    """Faithful re-implementation of the module's head. Matmul inputs are cast to
    bf16 with f32 accumulation, matching the torch module's bf16 linear layers."""
    bf16, f32 = jnp.bfloat16, jnp.float32
    N = x.shape[0]
    xb = x.astype(bf16)
    Q = jnp.dot(xb, p["wq_t"].astype(bf16), preferred_element_type=f32)
    KV = jnp.dot(mission_bf, p["wkv_t"].astype(bf16), preferred_element_type=f32)
    qk = jnp.dot(Q.astype(bf16), KV.astype(bf16).T,
                 preferred_element_type=f32) / math.sqrt(H)
    s = jax.nn.softmax(qk.reshape(N, C, T), axis=2).reshape(N, C * T)
    qkv = jnp.dot(s.astype(bf16), KV.astype(bf16), preferred_element_type=f32)
    y = jnp.dot(qkv.astype(bf16), p["wo_t"].astype(bf16),
                preferred_element_type=f32) + p["wo_b"] + x

    def ln(z):
        mu = z.mean(-1, keepdims=True)
        var = ((z - mu) ** 2).mean(-1, keepdims=True)
        return (z - mu) / jnp.sqrt(var + 1e-5) * p["ln_g"] + p["ln_b"]

    y = ln(y)
    y = jnp.dot(y.astype(bf16), p["ffn_t"].astype(bf16),
                preferred_element_type=f32) + p["ffn_b"] + y
    y = ln(y)
    return jnp.dot(y.astype(bf16), p["lm_t"].astype(bf16), preferred_element_type=f32)


# ---------------------------------- main -------------------------------------
if __name__ == "__main__":
    # small, forward-consistent shapes
    bz, length = 2, 8          # batch, sequence length
    H = 32                     # hidden_size
    C, T = 4, 8                # mission classes x texts per class
    V = 256                    # stand-in vocab (Vpad=256 -> exercises the V-tile grid axis)
    N = bz * length

    key = jax.random.PRNGKey(0)
    ks = jax.random.split(key, 10)
    f32 = jnp.float32

    # stand-in backbone: deterministic embedding table + attention-mask gating
    embed_table = jax.random.normal(ks[0], (V, H), f32) * 0.5
    input_ids = jax.random.randint(ks[1], (bz, length), 0, V)
    attention_mask = jnp.ones((bz, length), f32)

    hidden = jnp.take(embed_table, input_ids, axis=0) * attention_mask[..., None]
    # bf16 backbone (Qwen2.5 loaded in bf16) -> hidden states arrive in bf16.
    x_bf = hidden.reshape(N, H).astype(jnp.bfloat16)               # [N, H] bf16

    mission = jax.random.normal(ks[2], (C, T, H), f32) * 0.5       # mission_tensor
    mission_flat = mission.reshape(C * T, H)

    sc = 1.0 / math.sqrt(H)
    params = {
        # nn.Linear stores [out, in]; keep transposed [in, out] so `x @ w` applies it
        "wq_t":  jax.random.normal(ks[3], (H, 12 * H), f32) * sc,
        "wkv_t": jax.random.normal(ks[4], (H, 12 * H), f32) * sc,
        "wo_t":  jax.random.normal(ks[5], (12 * H, H), f32) * (1.0 / math.sqrt(12 * H)),
        "wo_b":  jax.random.normal(ks[6], (1, H), f32) * 0.01,
        "ffn_t": jax.random.normal(ks[7], (H, H), f32) * sc,
        "ffn_b": jax.random.normal(ks[8], (1, H), f32) * 0.01,
        "ln_g":  jnp.ones((1, H), f32),
        "ln_b":  jnp.zeros((1, H), f32),
        "lm_t":  jax.random.normal(ks[9], (H, V), f32) * sc,       # lm_head (no bias)
    }

    kp = prepare_kernel_params(params, mission_flat, H=H, C=C, T=T, V=V)

    # tile_n=8 / tile_v=128 so the toy run exercises both grid axes (row pipelining +
    # V-tiled lm_head); real-scale defaults live in sft_head's signature.
    try:
        logits_pad = sft_head(x_bf, kp, tile_n=8, tile_v=128)
        jax.block_until_ready(logits_pad)
    except Exception:
        # fallback for Mosaic versions that reject bf16 matmul outputs: f32 accumulate + cast
        logits_pad = sft_head(x_bf, kp, tile_n=8, tile_v=128, dot_out_dtype=jnp.float32)
        jax.block_until_ready(logits_pad)

    # padded vocab slots are exact 0; slice only here for the reference comparison
    logits = logits_pad[:, :V].reshape(bz, length, V)

    ref = sft_head_ref(x_bf.astype(f32), mission_flat.astype(jnp.bfloat16), params,
                       H=H, C=C, T=T).reshape(bz, length, V)
    # tolerance covers bf16 MXU rounding (incl. scale-folded WQ vs scale-after-matmul,
    # bf16 group-sum matmul, bf16 Q/qkv outputs) and the approximate EUP reciprocal.
    assert jnp.allclose(logits, ref, atol=5e-2, rtol=5e-2), "mismatch vs reference"

    print("KERNEL_OK")
</pallas_src>

<mosaic_0001>
module attributes {stable_mosaic.version = 11 : i64} {
  func.func @_sft_head_kernel(%arg0: i32, %arg1: i32, %arg2: memref<8x128xbf16, #tpu.memory_space<vmem>>, %arg3: memref<32x384xbf16, #tpu.memory_space<vmem>>, %arg4: memref<128x384xbf16, #tpu.memory_space<vmem>>, %arg5: memref<384x128xbf16, #tpu.memory_space<vmem>>, %arg6: memref<128x128xbf16, #tpu.memory_space<vmem>>, %arg7: memref<8x128xf32, #tpu.memory_space<vmem>>, %arg8: memref<32x32xbf16, #tpu.memory_space<vmem>>, %arg9: memref<128x128xbf16, #tpu.memory_space<vmem>>, %arg10: memref<8x128xf32, #tpu.memory_space<vmem>>, %arg11: memref<8x128xbf16, #tpu.memory_space<vmem>>) attributes {dimension_semantics = [#tpu.dimension_semantics<parallel>, #tpu.dimension_semantics<arbitrary>], iteration_bounds = array<i64: 2, 2>, scalar_prefetch = 0 : i64, scratch_operands = 1 : i64, tpu.core_type = #tpu.core_type<tc>, window_params = [{transform_indices = @transform_0, window_bounds = array<i64: 8, 128>}, {pipeline_mode = #tpu.pipeline_mode<synchronous>, transform_indices = @transform_1, window_bounds = array<i64: 32, 384>}, {pipeline_mode = #tpu.pipeline_mode<synchronous>, transform_indices = @transform_2, window_bounds = array<i64: 128, 384>}, {pipeline_mode = #tpu.pipeline_mode<synchronous>, transform_indices = @transform_3, window_bounds = array<i64: 384, 128>}, {pipeline_mode = #tpu.pipeline_mode<synchronous>, transform_indices = @transform_4, window_bounds = array<i64: 128, 128>}, {pipeline_mode = #tpu.pipeline_mode<synchronous>, transform_indices = @transform_5, window_bounds = array<i64: 8, 128>}, {pipeline_mode = #tpu.pipeline_mode<synchronous>, transform_indices = @transform_6, window_bounds = array<i64: 32, 32>}, {transform_indices = @transform_7, window_bounds = array<i64: 128, 128>}, {transform_indices = @transform_8, window_bounds = array<i64: 8, 128>}]} {
    %c0_i32 = arith.constant 0 : i32
    %0 = arith.cmpi eq, %arg1, %c0_i32 : i32
    %1 = arith.extui %0 : i1 to i32
    %c0_i32_0 = arith.constant 0 : i32
    %2 = arith.cmpi ne, %1, %c0_i32_0 : i32
    scf.if %2 {
      %c0_6 = arith.constant 0 : index
      %c0_7 = arith.constant 0 : index
      %7 = vector.load %arg2[%c0_6, %c0_7] : memref<8x128xbf16, #tpu.memory_space<vmem>>, vector<8x128xbf16>
      %8 = arith.extf %7 : vector<8x128xbf16> to vector<8x128xf32>
      %c0_8 = arith.constant 0 : index
      %c0_9 = arith.constant 0 : index
      %9 = vector.load %arg3[%c0_8, %c0_9] : memref<32x384xbf16, #tpu.memory_space<vmem>>, vector<32x384xbf16>
      %c0_10 = arith.constant 0 : index
      %c0_11 = arith.constant 0 : index
      %10 = vector.load %arg4[%c0_10, %c0_11] : memref<128x384xbf16, #tpu.memory_space<vmem>>, vector<128x384xbf16>
      %cst_12 = arith.constant dense<0.000000e+00> : vector<8x384xf32>
      %11 = tpu.matmul %7, %10, %cst_12 {dimension_numbers = #tpu.dot_dimension_numbers<[1], [0], [0], [1], [0, 0, 1, 1], [], []>} : vector<8x128xbf16>, vector<128x384xbf16>, vector<8x384xf32> -> vector<8x384xf32>
      %12 = arith.truncf %11 : vector<8x384xf32> to vector<8x384xbf16>
      %cst_13 = arith.constant dense<0.000000e+00> : vector<8x32xf32>
      %13 = tpu.matmul %12, %9, %cst_13 {dimension_numbers = #tpu.dot_dimension_numbers<[1], [1], [0], [0], [0, 0, 1, 0], [], []>} : vector<8x384xbf16>, vector<32x384xbf16>, vector<8x32xf32> -> vector<8x32xf32>
      %cst_14 = arith.constant dense<0xFF800000> : vector<8xf32>
      %14 = vector.multi_reduction <maximumf>, %13, %cst_14 [1] : vector<8x32xf32> to vector<8xf32>
      %15 = vector.shape_cast %14 : vector<8xf32> to vector<8x1xf32>
      %16 = vector.broadcast %15 : vector<8x1xf32> to vector<8x32xf32>
      %17 = arith.subf %13, %16 : vector<8x32xf32>
      %18 = math.exp %17 : vector<8x32xf32>
      %19 = arith.truncf %18 : vector<8x32xf32> to vector<8x32xbf16>
      %c0_15 = arith.constant 0 : index
      %c0_16 = arith.constant 0 : index
      %20 = vector.load %arg8[%c0_15, %c0_16] : memref<32x32xbf16, #tpu.memory_space<vmem>>, vector<32x32xbf16>
      %cst_17 = arith.constant dense<0.000000e+00> : vector<8x32xf32>
      %21 = tpu.matmul %19, %20, %cst_17 {dimension_numbers = #tpu.dot_dimension_numbers<[1], [0], [0], [1], [0, 0, 1, 1], [], []>} : vector<8x32xbf16>, vector<32x32xbf16>, vector<8x32xf32> -> vector<8x32xf32>
      %22 = tpu.reciprocal %21 {approx = true} : vector<8x32xf32> -> vector<8x32xf32>
      %23 = arith.mulf %18, %22 : vector<8x32xf32>
      %24 = arith.truncf %23 : vector<8x32xf32> to vector<8x32xbf16>
      %cst_18 = arith.constant dense<0.000000e+00> : vector<8x384xf32>
      %25 = tpu.matmul %24, %9, %cst_18 {dimension_numbers = #tpu.dot_dimension_numbers<[1], [0], [0], [1], [0, 0, 1, 1], [], []>} : vector<8x32xbf16>, vector<32x384xbf16>, vector<8x384xf32> -> vector<8x384xf32>
      %26 = arith.truncf %25 : vector<8x384xf32> to vector<8x384xbf16>
      %c0_19 = arith.constant 0 : index
      %c0_20 = arith.constant 0 : index
      %27 = vector.load %arg7[%c0_19, %c0_20] : memref<8x128xf32, #tpu.memory_space<vmem>>, vector<1x128xf32>
      %c1 = arith.constant 1 : index
      %c0_21 = arith.constant 0 : index
      %28 = vector.load %arg7[%c1, %c0_21] : memref<8x128xf32, #tpu.memory_space<vmem>>, vector<1x128xf32>
      %c2 = arith.constant 2 : index
      %c0_22 = arith.constant 0 : index
      %29 = vector.load %arg7[%c2, %c0_22] : memref<8x128xf32, #tpu.memory_space<vmem>>, vector<1x128xf32>
      %c3 = arith.constant 3 : index
      %c0_23 = arith.constant 0 : index
      %30 = vector.load %arg7[%c3, %c0_23] : memref<8x128xf32, #tpu.memory_space<vmem>>, vector<1x128xf32>
      %c0_24 = arith.constant 0 : index
      %c0_25 = arith.constant 0 : index
      %31 = vector.load %arg5[%c0_24, %c0_25] : memref<384x128xbf16, #tpu.memory_space<vmem>>, vector<384x128xbf16>
      %cst_26 = arith.constant dense<0.000000e+00> : vector<8x128xf32>
      %32 = tpu.matmul %26, %31, %cst_26 {dimension_numbers = #tpu.dot_dimension_numbers<[1], [0], [0], [1], [0, 0, 1, 1], [], []>} : vector<8x384xbf16>, vector<384x128xbf16>, vector<8x128xf32> -> vector<8x128xf32>
      %33 = vector.broadcast %27 : vector<1x128xf32> to vector<8x128xf32>
      %34 = arith.addf %32, %33 : vector<8x128xf32>
      %35 = arith.addf %34, %8 : vector<8x128xf32>
      %cst_27 = arith.constant dense<0.000000e+00> : vector<8xf32>
      %36 = vector.multi_reduction <add>, %35, %cst_27 [1] : vector<8x128xf32> to vector<8xf32>
      %37 = vector.shape_cast %36 : vector<8xf32> to vector<8x1xf32>
      %cst_28 = arith.constant 3.125000e-02 : f32
      %38 = vector.broadcast %cst_28 : f32 to vector<8x1xf32>
      %39 = arith.mulf %37, %38 : vector<8x1xf32>
      %40 = arith.mulf %35, %35 : vector<8x128xf32>
      %cst_29 = arith.constant dense<0.000000e+00> : vector<8xf32>
      %41 = vector.multi_reduction <add>, %40, %cst_29 [1] : vector<8x128xf32> to vector<8xf32>
      %42 = vector.shape_cast %41 : vector<8xf32> to vector<8x1xf32>
      %cst_30 = arith.constant 3.125000e-02 : f32
      %43 = vector.broadcast %cst_30 : f32 to vector<8x1xf32>
      %44 = arith.mulf %42, %43 : vector<8x1xf32>
      %45 = arith.mulf %39, %39 : vector<8x1xf32>
      %46 = arith.subf %44, %45 : vector<8x1xf32>
      %47 = vector.broadcast %39 : vector<8x1xf32> to vector<8x128xf32>
      %48 = arith.subf %35, %47 : vector<8x128xf32>
      %cst_31 = arith.constant 9.99999974E-6 : f32
      %49 = vector.broadcast %cst_31 : f32 to vector<8x1xf32>
      %50 = arith.addf %46, %49 : vector<8x1xf32>
      %51 = math.rsqrt %50 : vector<8x1xf32>
      %52 = vector.broadcast %51 : vector<8x1xf32> to vector<8x128xf32>
      %53 = arith.mulf %48, %52 : vector<8x128xf32>
      %54 = vector.broadcast %29 : vector<1x128xf32> to vector<8x128xf32>
      %55 = arith.mulf %53, %54 : vector<8x128xf32>
      %56 = vector.broadcast %30 : vector<1x128xf32> to vector<8x128xf32>
      %57 = arith.addf %55, %56 : vector<8x128xf32>
      %58 = arith.truncf %57 : vector<8x128xf32> to vector<8x128xbf16>
      %c0_32 = arith.constant 0 : index
      %c0_33 = arith.constant 0 : index
      %59 = vector.load %arg6[%c0_32, %c0_33] : memref<128x128xbf16, #tpu.memory_space<vmem>>, vector<128x128xbf16>
      %cst_34 = arith.constant dense<0.000000e+00> : vector<8x128xf32>
      %60 = tpu.matmul %58, %59, %cst_34 {dimension_numbers = #tpu.dot_dimension_numbers<[1], [0], [0], [1], [0, 0, 1, 1], [], []>} : vector<8x128xbf16>, vector<128x128xbf16>, vector<8x128xf32> -> vector<8x128xf32>
      %61 = vector.broadcast %28 : vector<1x128xf32> to vector<8x128xf32>
      %62 = arith.addf %60, %61 : vector<8x128xf32>
      %63 = arith.addf %62, %57 : vector<8x128xf32>
      %cst_35 = arith.constant dense<0.000000e+00> : vector<8xf32>
      %64 = vector.multi_reduction <add>, %63, %cst_35 [1] : vector<8x128xf32> to vector<8xf32>
      %65 = vector.shape_cast %64 : vector<8xf32> to vector<8x1xf32>
      %cst_36 = arith.constant 3.125000e-02 : f32
      %66 = vector.broadcast %cst_36 : f32 to vector<8x1xf32>
      %67 = arith.mulf %65, %66 : vector<8x1xf32>
      %68 = arith.mulf %63, %63 : vector<8x128xf32>
      %cst_37 = arith.constant dense<0.000000e+00> : vector<8xf32>
      %69 = vector.multi_reduction <add>, %68, %cst_37 [1] : vector<8x128xf32> to vector<8xf32>
      %70 = vector.shape_cast %69 : vector<8xf32> to vector<8x1xf32>
      %cst_38 = arith.constant 3.125000e-02 : f32
      %71 = vector.broadcast %cst_38 : f32 to vector<8x1xf32>
      %72 = arith.mulf %70, %71 : vector<8x1xf32>
      %73 = arith.mulf %67, %67 : vector<8x1xf32>
      %74 = arith.subf %72, %73 : vector<8x1xf32>
      %75 = vector.broadcast %67 : vector<8x1xf32> to vector<8x128xf32>
      %76 = arith.subf %63, %75 : vector<8x128xf32>
      %cst_39 = arith.constant 9.99999974E-6 : f32
      %77 = vector.broadcast %cst_39 : f32 to vector<8x1xf32>
      %78 = arith.addf %74, %77 : vector<8x1xf32>
      %79 = math.rsqrt %78 : vector<8x1xf32>
      %80 = vector.broadcast %79 : vector<8x1xf32> to vector<8x128xf32>
      %81 = arith.mulf %76, %80 : vector<8x128xf32>
      %82 = vector.broadcast %29 : vector<1x128xf32> to vector<8x128xf32>
      %83 = arith.mulf %81, %82 : vector<8x128xf32>
      %84 = vector.broadcast %30 : vector<1x128xf32> to vector<8x128xf32>
      %85 = arith.addf %83, %84 : vector<8x128xf32>
      %86 = arith.truncf %85 : vector<8x128xf32> to vector<8x128xbf16>
      %c0_40 = arith.constant 0 : index
      %c0_41 = arith.constant 0 : index
      %87 = vector.load %arg11[%c0_40, %c0_41] : memref<8x128xbf16, #tpu.memory_space<vmem>>, vector<8x128xbf16>
      tpu.vector_store %arg11[%c0_40, %c0_41], %86 {strides = array<i32>} : memref<8x128xbf16, #tpu.memory_space<vmem>>, vector<8x128xbf16>,
    } else {
    }
    %c0 = arith.constant 0 : index
    %c0_1 = arith.constant 0 : index
    %3 = vector.load %arg11[%c0, %c0_1] : memref<8x128xbf16, #tpu.memory_space<vmem>>, vector<8x128xbf16>
    %c0_2 = arith.constant 0 : index
    %c0_3 = arith.constant 0 : index
    %4 = vector.load %arg9[%c0_2, %c0_3] : memref<128x128xbf16, #tpu.memory_space<vmem>>, vector<128x128xbf16>
    %cst = arith.constant dense<0.000000e+00> : vector<8x128xf32>
    %5 = tpu.matmul %3, %4, %cst {dimension_numbers = #tpu.dot_dimension_numbers<[1], [0], [0], [1], [0, 0, 1, 1], [], []>} : vector<8x128xbf16>, vector<128x128xbf16>, vector<8x128xf32> -> vector<8x128xf32>
    %c0_4 = arith.constant 0 : index
    %c0_5 = arith.constant 0 : index
    %6 = vector.load %arg10[%c0_4, %c0_5] : memref<8x128xf32, #tpu.memory_space<vmem>>, vector<8x128xf32>
    tpu.vector_store %arg10[%c0_4, %c0_5], %5 {strides = array<i32>} : memref<8x128xf32, #tpu.memory_space<vmem>>, vector<8x128xf32>,
    return
  }
  func.func @transform_0(%arg0: i32, %arg1: i32) -> (i32, i32) {
    %c0_i32 = arith.constant 0 : i32
    %c0_i32_0 = arith.constant 0 : i32
    return %arg0, %c0_i32 : i32, i32
  }
  func.func @transform_1(%arg0: i32, %arg1: i32) -> (i32, i32) {
    %c0_i32 = arith.constant 0 : i32
    %c0_i32_0 = arith.constant 0 : i32
    %c0_i32_1 = arith.constant 0 : i32
    return %c0_i32, %c0_i32_0 : i32, i32
  }
  func.func @transform_2(%arg0: i32, %arg1: i32) -> (i32, i32) {
    %c0_i32 = arith.constant 0 : i32
    %c0_i32_0 = arith.constant 0 : i32
    %c0_i32_1 = arith.constant 0 : i32
    return %c0_i32, %c0_i32_0 : i32, i32
  }
  func.func @transform_3(%arg0: i32, %arg1: i32) -> (i32, i32) {
    %c0_i32 = arith.constant 0 : i32
    %c0_i32_0 = arith.constant 0 : i32
    %c0_i32_1 = arith.constant 0 : i32
    return %c0_i32, %c0_i32_0 : i32, i32
  }
  func.func @transform_4(%arg0: i32, %arg1: i32) -> (i32, i32) {
    %c0_i32 = arith.constant 0 : i32
    %c0_i32_0 = arith.constant 0 : i32
    %c0_i32_1 = arith.constant 0 : i32
    return %c0_i32, %c0_i32_0 : i32, i32
  }
  func.func @transform_5(%arg0: i32, %arg1: i32) -> (i32, i32) {
    %c0_i32 = arith.constant 0 : i32
    %c0_i32_0 = arith.constant 0 : i32
    %c0_i32_1 = arith.constant 0 : i32
    return %c0_i32, %c0_i32_0 : i32, i32
  }
  func.func @transform_6(%arg0: i32, %arg1: i32) -> (i32, i32) {
    %c0_i32 = arith.constant 0 : i32
    %c0_i32_0 = arith.constant 0 : i32
    %c0_i32_1 = arith.constant 0 : i32
    return %c0_i32, %c0_i32_0 : i32, i32
  }
  func.func @transform_7(%arg0: i32, %arg1: i32) -> (i32, i32) {
    %c0_i32 = arith.constant 0 : i32
    %c0_i32_0 = arith.constant 0 : i32
    return %c0_i32, %arg1 : i32, i32
  }
  func.func @transform_8(%arg0: i32, %arg1: i32) -> (i32, i32) {
    %c0_i32 = arith.constant 0 : i32
    return %arg0, %arg1 : i32, i32
  }
}

</mosaic_0001>

<llo_original>
// kernel: tpu_custom_call.1
$region0: #{tpu_custom_call.1}
  #allocation0 [shape = 'u32[]', space=smem, size = 0x4, offset = 0x4, fixed_abs, tag = 'smem constant byte address 0x4 - core index']
  #allocation1 [shape = 'u32[144,128]{1,0:T(1,128)}', space=vmem, size = 0x12000, scoped, tag = 'internal scratch']
  #allocation2 [shape = 'bf16[8,128]{1,0:T(8,128)(2,1)}', space=vmem, size = 0x800, scoped, tag = 'scratch operand']
  %s0 = inlined_call_operand.hbm [shape: bf16[16,128], index: 0, kind: input, shape index: {}]
  %s1 = inlined_call_operand.hbm [shape: bf16[32,384], index: 1, kind: input, shape index: {}]
  %s2 = inlined_call_operand.hbm [shape: bf16[128,384], index: 2, kind: input, shape index: {}]
  %s3 = inlined_call_operand.hbm [shape: bf16[384,128], index: 3, kind: input, shape index: {}]
  %s4 = inlined_call_operand.hbm [shape: bf16[128,128], index: 4, kind: input, shape index: {}]
  %s5 = inlined_call_operand.vmem [shape: f32[8,128], index: 5, kind: input, shape index: {}]
  %s6 = inlined_call_operand.hbm [shape: bf16[32,32], index: 6, kind: input, shape index: {}]
  %s7 = inlined_call_operand.hbm [shape: bf16[128,256], index: 7, kind: input, shape index: {}]
  %s8 = inlined_call_operand.hbm [shape: f32[16,256], index: 8, kind: output, shape index: {}]
  %s9 = sld [smem:[#allocation0]]
  $region97: #{tpu_custom_call.1} parent=0
    _
  %s11 = ssub.s32 1, %s9
  %s12 = scalar_select 0, %s11, %s9
  $region1: #{tpu_custom_call.1} parent=0
    #allocation3 [shape = 'u8[4096]{0}', space=vmem, size = 0x1000, scoped, tag = 'input window, operand 0']
    #allocation4 [shape = 's32[2]{0}', space=sflag, size = 0x8, scoped, tag = 'scoped memory for tpu_custom_call.1']
    #allocation5 [shape = 's32[2]{0}', space=sflag, size = 0x8, scoped, tag = 'scoped memory for tpu_custom_call.1']
    #allocation6 [shape = 'u8[24576]{0}', space=vmem, size = 0x6000, scoped, tag = 'input window, operand 1, single buffered']
    #allocation7 [shape = 's32[1]{0}', space=sflag, size = 0x4, scoped, tag = 'scoped memory for tpu_custom_call.1']
    #allocation8 [shape = 'u8[98304]{0}', space=vmem, size = 0x18000, scoped, tag = 'input window, operand 2, single buffered']
    #allocation9 [shape = 'u8[98304]{0}', space=vmem, size = 0x18000, scoped, tag = 'input window, operand 3, single buffered']
    #allocation10 [shape = 's32[1]{0}', space=sflag, size = 0x4, scoped, tag = 'scoped memory for tpu_custom_call.1']
    #allocation11 [shape = 'u8[32768]{0}', space=vmem, size = 0x8000, scoped, tag = 'input window, operand 4, single buffered']
    #allocation12 [shape = 'u8[8192]{0}', space=vmem, size = 0x2000, scoped, tag = 'input window, operand 6, single buffered']
    #allocation13 [shape = 's32[1]{0}', space=sflag, size = 0x4, scoped, tag = 'scoped memory for tpu_custom_call.1']
    #allocation14 [shape = 'u8[65536]{0}', space=vmem, size = 0x10000, scoped, tag = 'input window, operand 7']
    #allocation15 [shape = 'u8[8192]{0}', space=vmem, size = 0x2000, scoped, tag = 'output window, operand 0']
    %13 = vsyncpa [#allocation4], 0
    %s14 = scalar_lea.sflag [#allocation4], 1
    %15 = vsyncpa %s14, 0
    %16 = vsyncpa [#allocation7], 0
    %17 = vsyncpa [#allocation10], 0
    %18 = vsyncpa [#allocation13], 0
    %19 = vsyncpa [#allocation5], 0
    %s20 = scalar_lea.sflag [#allocation5], 1
    %21 = vsyncpa %s20, 0
    loop: start=0, step=1, limit=6
    $region2: #{tpu_custom_call.1} parent=1 // loop_pre_header
      _
    $region3: #{tpu_custom_call.1} parent=1 // loop_header
      %s23 = sphi 0, %s27
      %p24 = scmp.ge.s32.totalorder %s23, 6
      %s30 = sphi 0, %s42
      %s31 = sphi 0, %s38
      %s32 = sphi 0, %s30
      %s33 = sphi 0, %s31
      %s34 = sphi 0, %s32
      %s35 = sphi 0, %s33
      %s45 = sphi 0, %s47
      %s48 = sphi 0, %s45
      %s49 = sphi 0, %s48
      %s65 = sphi 0, %s49
      %s69 = sphi 0, %s69
      %s71 = sphi 0, %s69
      %s72 = sphi 0, %s71
      %s86 = sphi 0, %s72
      %s90 = sphi 0, %s90
      %s92 = sphi 0, %s90
      %s93 = sphi 0, %s92
      %s107 = sphi 0, %s93
      %s111 = sphi 0, %s111
      %s113 = sphi 0, %s111
      %s114 = sphi 0, %s113
      %s128 = sphi 0, %s114
      %s132 = sphi 0, %s132
      %s134 = sphi 0, %s132
      %s135 = sphi 0, %s134
      %s149 = sphi 0, %s135
      %s153 = sphi 0, %s153
      %s155 = sphi 0, %s153
      %s156 = sphi 0, %s155
      %s170 = sphi 0, %s156
      %s174 = sphi 0, %s174
      %s176 = sphi 0, %s174
      %s177 = sphi 0, %s176
      %s191 = sphi 0, %s177
      %s197 = sphi 0, %s199
      %s200 = sphi 0, %s197
      %s201 = sphi 0, %s200
      %s217 = sphi 0, %s201
      %s225 = sphi 0, %s227
      %s228 = sphi 0, %s225
      %s229 = sphi 0, %s228
      %s245 = sphi 0, %s229
    $region4: #{tpu_custom_call.1} parent=1 // loop_header_branch
      %26 = sbr.rel (%p24) target = $region8
    $region5: #{tpu_custom_call.1} parent=1 // loop_body
      %s28 = ssub.s32 %s23, 1
      %s29 = ssub.s32 %s23, 2
      %s36 = sadd.s32 1, %s31
      %p37 = scmp.ge.s32.totalorder %s36, 2
      %s38 = scalar_select %p37, 0, %s36
      %s39 = sadd.s32 1, %s30
      %s40 = scalar_select %p37, %s39, %s30
      %p41 = scmp.ge.s32.totalorder %s40, 2
      %s42 = scalar_select %p41, 0, %s40
      %s43 = ssub.s32 %s30, %s42
      %p44 = scmp.eq.s32.totalorder %s43, 0
      %s46 = sadd.s32 %s45, 1
      %s47 = scalar_select %p44, %s45, %s46
      %p50 = pneg %p44
      %p51 = scmp.eq.s32.totalorder %s23, 3
      %p52 = por %p50, %p51
      %p53 = scmp.ne.s32.totalorder %s45, %s48
      %p54 = scmp.eq.s32.totalorder %s23, 0
      %p55 = por %p53, %p54
      %p56 = scmp.ne.s32.totalorder %s45, %s48
      %p57 = scmp.eq.s32.totalorder %s28, 3
      %p58 = por %p56, %p57
      %p59 = scmp.ne.s32.totalorder %s48, %s49
      %p60 = scmp.eq.s32.totalorder %s28, 0
      %p61 = por %p59, %p60
      %p62 = scmp.ne.s32.totalorder %s48, %s49
      %p63 = scmp.eq.s32.totalorder %s29, 3
      %p64 = por %p62, %p63
      %p66 = scmp.ne.s32.totalorder %s49, %s65
      %p67 = scmp.eq.s32.totalorder %s29, 0
      %p68 = por %p66, %p67
      %s70 = sadd.s32 %s69, 1
      %p73 = scmp.eq.s32.totalorder %s23, 3
      %p74 = scmp.ne.s32.totalorder %s69, %s71
      %p75 = scmp.eq.s32.totalorder %s23, 0
      %p76 = por %p74, %p75
      %p77 = scmp.ne.s32.totalorder %s69, %s71
      %p78 = scmp.eq.s32.totalorder %s28, 3
      %p79 = por %p77, %p78
      %p80 = scmp.ne.s32.totalorder %s71, %s72
      %p81 = scmp.eq.s32.totalorder %s28, 0
      %p82 = por %p80, %p81
      %p83 = scmp.ne.s32.totalorder %s71, %s72
      %p84 = scmp.eq.s32.totalorder %s29, 3
      %p85 = por %p83, %p84
      %p87 = scmp.ne.s32.totalorder %s72, %s86
      %p88 = scmp.eq.s32.totalorder %s29, 0
      %p89 = por %p87, %p88
      %s91 = sadd.s32 %s90, 1
      %p94 = scmp.eq.s32.totalorder %s23, 3
      %p95 = scmp.ne.s32.totalorder %s90, %s92
      %p96 = scmp.eq.s32.totalorder %s23, 0
      %p97 = por %p95, %p96
      %p98 = scmp.ne.s32.totalorder %s90, %s92
      %p99 = scmp.eq.s32.totalorder %s28, 3
      %p100 = por %p98, %p99
      %p101 = scmp.ne.s32.totalorder %s92, %s93
      %p102 = scmp.eq.s32.totalorder %s28, 0
      %p103 = por %p101, %p102
      %p104 = scmp.ne.s32.totalorder %s92, %s93
      %p105 = scmp.eq.s32.totalorder %s29, 3
      %p106 = por %p104, %p105
      %p108 = scmp.ne.s32.totalorder %s93, %s107
      %p109 = scmp.eq.s32.totalorder %s29, 0
      %p110 = por %p108, %p109
      %s112 = sadd.s32 %s111, 1
      %p115 = scmp.eq.s32.totalorder %s23, 3
      %p116 = scmp.ne.s32.totalorder %s111, %s113
      %p117 = scmp.eq.s32.totalorder %s23, 0
      %p118 = por %p116, %p117
      %p119 = scmp.ne.s32.totalorder %s111, %s113
      %p120 = scmp.eq.s32.totalorder %s28, 3
      %p121 = por %p119, %p120
      %p122 = scmp.ne.s32.totalorder %s113, %s114
      %p123 = scmp.eq.s32.totalorder %s28, 0
      %p124 = por %p122, %p123
      %p125 = scmp.ne.s32.totalorder %s113, %s114
      %p126 = scmp.eq.s32.totalorder %s29, 3
      %p127 = por %p125, %p126
      %p129 = scmp.ne.s32.totalorder %s114, %s128
      %p130 = scmp.eq.s32.totalorder %s29, 0
      %p131 = por %p129, %p130
      %s133 = sadd.s32 %s132, 1
      %p136 = scmp.eq.s32.totalorder %s23, 3
      %p137 = scmp.ne.s32.totalorder %s132, %s134
      %p138 = scmp.eq.s32.totalorder %s23, 0
      %p139 = por %p137, %p138
      %p140 = scmp.ne.s32.totalorder %s132, %s134
      %p141 = scmp.eq.s32.totalorder %s28, 3
      %p142 = por %p140, %p141
      %p143 = scmp.ne.s32.totalorder %s134, %s135
      %p144 = scmp.eq.s32.totalorder %s28, 0
      %p145 = por %p143, %p144
      %p146 = scmp.ne.s32.totalorder %s134, %s135
      %p147 = scmp.eq.s32.totalorder %s29, 3
      %p148 = por %p146, %p147
      %p150 = scmp.ne.s32.totalorder %s135, %s149
      %p151 = scmp.eq.s32.totalorder %s29, 0
      %p152 = por %p150, %p151
      %s154 = sadd.s32 %s153, 1
      %p157 = scmp.eq.s32.totalorder %s23, 3
      %p158 = scmp.ne.s32.totalorder %s153, %s155
      %p159 = scmp.eq.s32.totalorder %s23, 0
      %p160 = por %p158, %p159
      %p161 = scmp.ne.s32.totalorder %s153, %s155
      %p162 = scmp.eq.s32.totalorder %s28, 3
      %p163 = por %p161, %p162
      %p164 = scmp.ne.s32.totalorder %s155, %s156
      %p165 = scmp.eq.s32.totalorder %s28, 0
      %p166 = por %p164, %p165
      %p167 = scmp.ne.s32.totalorder %s155, %s156
      %p168 = scmp.eq.s32.totalorder %s29, 3
      %p169 = por %p167, %p168
      %p171 = scmp.ne.s32.totalorder %s156, %s170
      %p172 = scmp.eq.s32.totalorder %s29, 0
      %p173 = por %p171, %p172
      %s175 = sadd.s32 %s174, 1
      %p178 = scmp.eq.s32.totalorder %s23, 3
      %p179 = scmp.ne.s32.totalorder %s174, %s176
      %p180 = scmp.eq.s32.totalorder %s23, 0
      %p181 = por %p179, %p180
      %p182 = scmp.ne.s32.totalorder %s174, %s176
      %p183 = scmp.eq.s32.totalorder %s28, 3
      %p184 = por %p182, %p183
      %p185 = scmp.ne.s32.totalorder %s176, %s177
      %p186 = scmp.eq.s32.totalorder %s28, 0
      %p187 = por %p185, %p186
      %p188 = scmp.ne.s32.totalorder %s176, %s177
      %p189 = scmp.eq.s32.totalorder %s29, 3
      %p190 = por %p188, %p189
      %p192 = scmp.ne.s32.totalorder %s177, %s191
      %p193 = scmp.eq.s32.totalorder %s29, 0
      %p194 = por %p192, %p193
      %s195 = ssub.s32 %s31, %s38
      %p196 = scmp.eq.s32.totalorder %s195, 0
      %s198 = sadd.s32 %s197, 1
      %s199 = scalar_select %p196, %s197, %s198
      %p202 = pneg %p196
      %p203 = scmp.eq.s32.totalorder %s23, 3
      %p204 = por %p202, %p203
      %p205 = scmp.ne.s32.totalorder %s197, %s200
      %p206 = scmp.eq.s32.totalorder %s23, 0
      %p207 = por %p205, %p206
      %p208 = scmp.ne.s32.totalorder %s197, %s200
      %p209 = scmp.eq.s32.totalorder %s28, 3
      %p210 = por %p208, %p209
      %p211 = scmp.ne.s32.totalorder %s200, %s201
      %p212 = scmp.eq.s32.totalorder %s28, 0
      %p213 = por %p211, %p212
      %p214 = scmp.ne.s32.totalorder %s200, %s201
      %p215 = scmp.eq.s32.totalorder %s29, 3
      %p216 = por %p214, %p215
      %p218 = scmp.ne.s32.totalorder %s201, %s217
      %p219 = scmp.eq.s32.totalorder %s29, 0
      %p220 = por %p218, %p219
      %s221 = ssub.s32 %s30, %s42
      %s222 = ssub.s32 %s31, %s38
      %s223 = sor.u32 %s221, %s222
      %p224 = scmp.eq.s32.totalorder %s223, 0
      %s226 = sadd.s32 %s225, 1
      %s227 = scalar_select %p224, %s225, %s226
      %p230 = pneg %p224
      %p231 = scmp.eq.s32.totalorder %s23, 3
      %p232 = por %p230, %p231
      %p233 = scmp.ne.s32.totalorder %s225, %s228
      %p234 = scmp.eq.s32.totalorder %s23, 0
      %p235 = por %p233, %p234
      %p236 = scmp.ne.s32.totalorder %s225, %s228
      %p237 = scmp.eq.s32.totalorder %s28, 3
      %p238 = por %p236, %p237
      %p239 = scmp.ne.s32.totalorder %s228, %s229
      %p240 = scmp.eq.s32.totalorder %s28, 0
      %p241 = por %p239, %p240
      %p242 = scmp.ne.s32.totalorder %s228, %s229
      %p243 = scmp.eq.s32.totalorder %s29, 3
      %p244 = por %p242, %p243
      %p246 = scmp.ne.s32.totalorder %s229, %s245
      %p247 = scmp.eq.s32.totalorder %s29, 0
      %p248 = por %p246, %p247
      %p249 = scmp.le.s32.totalorder 1, %s23
      %p250 = scmp.lt.s32.totalorder %s23, 5
      %p251 = pnand %p249, %p250
      %p252 = pneg %p251
      // Predicated region
      $region9: #{tpu_custom_call.1} parent=5 // pred_check
        _
      $region10: #{tpu_custom_call.1} parent=5 // pred_check_branch
        %254 = sbr.rel (%p251) target = $region12
      $region11: #{tpu_custom_call.1} parent=5 // pred_region
        %s255 = ssub.s32 %s23, 1
        // Predicated region
        $region13: #{tpu_custom_call.1} parent=11 // pred_check
          %p256 = pneg %p82
        $region14: #{tpu_custom_call.1} parent=11 // pred_check_branch
          %258 = sbr.rel (%p256) target = $region16
        $region15: #{tpu_custom_call.1} parent=11 // pred_region
          %s260 = ssub.s32 768, 768
          %261 = vsyncadd [#allocation7], %s260
          %s262 = sshll.u32 [#allocation6], 4
          %s263 = int_to_ptr.vmem [resolvable:$true] %s262
          %268 = dma.hbm_to_vmem [thread:$0]  %s1, 768, %s263, [#allocation7], 192, 192, 12
        $region16: #{tpu_custom_call.1} parent=11 // pred_fallthru
          _
        // Predicated region
        $region17: #{tpu_custom_call.1} parent=11 // pred_check
          %p269 = pneg %p103
        $region18: #{tpu_custom_call.1} parent=11 // pred_check_branch
          %271 = sbr.rel (%p269) target = $region20
        $region19: #{tpu_custom_call.1} parent=11 // pred_region
          %s273 = ssub.s32 3072, 3072
          %274 = vsyncadd [#allocation7], %s273
          %s275 = sshll.u32 [#allocation8], 4
          %s276 = int_to_ptr.vmem [resolvable:$true] %s275
          %281 = dma.hbm_to_vmem [thread:$0]  %s2, 3072, %s276, [#allocation7], 192, 192, 12
        $region20: #{tpu_custom_call.1} parent=11 // pred_fallthru
          _
        // Predicated region
        $region21: #{tpu_custom_call.1} parent=11 // pred_check
          %p282 = pneg %p124
        $region22: #{tpu_custom_call.1} parent=11 // pred_check_branch
          %284 = sbr.rel (%p282) target = $region24
        $region23: #{tpu_custom_call.1} parent=11 // pred_region
          %s286 = ssub.s32 3072, 3072
          %287 = vsyncadd [#allocation10], %s286
          %s288 = sshll.u32 [#allocation9], 4
          %s289 = int_to_ptr.vmem [resolvable:$true] %s288
          %294 = dma.hbm_to_vmem [thread:$0]  %s3, 3072, %s289, [#allocation10], 64, 64, 4
        $region24: #{tpu_custom_call.1} parent=11 // pred_fallthru
          _
        // Predicated region
        $region25: #{tpu_custom_call.1} parent=11 // pred_check
          %p295 = pneg %p145
        $region26: #{tpu_custom_call.1} parent=11 // pred_check_branch
          %297 = sbr.rel (%p295) target = $region28
        $region27: #{tpu_custom_call.1} parent=11 // pred_region
          %s299 = ssub.s32 1024, 1024
          %300 = vsyncadd [#allocation10], %s299
          %s301 = sshll.u32 [#allocation11], 4
          %s302 = int_to_ptr.vmem [resolvable:$true] %s301
          %307 = dma.hbm_to_vmem [thread:$0]  %s4, 1024, %s302, [#allocation10], 64, 64, 4
        $region28: #{tpu_custom_call.1} parent=11 // pred_fallthru
          _
        // Predicated region
        $region29: #{tpu_custom_call.1} parent=11 // pred_check
          %p308 = pneg %p166
        $region30: #{tpu_custom_call.1} parent=11 // pred_check_branch
          %310 = sbr.rel (%p308) target = $region32
        $region31: #{tpu_custom_call.1} parent=11 // pred_region
          _
        $region32: #{tpu_custom_call.1} parent=11 // pred_fallthru
          _
        // Predicated region
        $region33: #{tpu_custom_call.1} parent=11 // pred_check
          %p311 = pneg %p187
        $region34: #{tpu_custom_call.1} parent=11 // pred_check_branch
          %313 = sbr.rel (%p311) target = $region36
        $region35: #{tpu_custom_call.1} parent=11 // pred_region
          %s315 = ssub.s32 256, 256
          %316 = vsyncadd [#allocation13], %s315
          %s317 = sshll.u32 [#allocation12], 4
          %s318 = int_to_ptr.vmem [resolvable:$true] %s317
          %323 = dma.hbm_to_vmem [thread:$0]  %s6, 256, %s318, [#allocation13], 64, 64, 4
        $region36: #{tpu_custom_call.1} parent=11 // pred_fallthru
          _
      $region12: #{tpu_custom_call.1} parent=5 // pred_fallthru
        _
      %p324 = scmp.lt.s32.totalorder %s23, 4
      // Predicated region
      $region37: #{tpu_custom_call.1} parent=5 // pred_check
        %p325 = pneg %p324
      $region38: #{tpu_custom_call.1} parent=5 // pred_check_branch
        %327 = sbr.rel (%p325) target = $region40
      $region39: #{tpu_custom_call.1} parent=5 // pred_region
        // Predicated region
        $region41: #{tpu_custom_call.1} parent=39 // pred_check
          %p328 = pneg %p55
        $region42: #{tpu_custom_call.1} parent=39 // pred_check_branch
          %330 = sbr.rel (%p328) target = $region44
        $region43: #{tpu_custom_call.1} parent=39 // pred_region
          %s331 = sand.u32 %s23, 1
          %s332 = scalar_lea.sflag [#allocation4], %s331
          %s333 = sand.u32 %s45, 1
          %s334 = smul.addr %s333, 4
          %s335 = scalar_lea.vmem [#allocation3], %s334
          %s337 = ssub.s32 64, 64
          %338 = vsyncadd %s332, %s337
          %s339 = smul.addr %s30, 64
          %s340 = scalar_lea.hbm %s0, %s339
          %s342 = sshll.u32 %s335, 4
          %s343 = int_to_ptr.vmem [resolvable:$true] %s342
          %345 = dma.hbm_to_vmem [thread:$0]  %s340, 64, %s343, %s332
        $region44: #{tpu_custom_call.1} parent=39 // pred_fallthru
          _
        // Predicated region
        $region45: #{tpu_custom_call.1} parent=39 // pred_check
          %p346 = pneg %p207
        $region46: #{tpu_custom_call.1} parent=39 // pred_check_branch
          %348 = sbr.rel (%p346) target = $region48
        $region47: #{tpu_custom_call.1} parent=39 // pred_region
          %s349 = sand.u32 %s23, 1
          %s350 = scalar_lea.sflag [#allocation4], %s349
          %s351 = sand.u32 %s197, 1
          %s352 = smul.addr %s351, 64
          %s353 = scalar_lea.vmem [#allocation14], %s352
          %s355 = ssub.s32 1024, 1024
          %356 = vsyncadd %s350, %s355
          %s357 = smul.addr %s31, 64
          %s358 = scalar_lea.hbm %s7, %s357
          %s359 = sshll.u32 %s353, 4
          %s360 = int_to_ptr.vmem [resolvable:$true] %s359
          %365 = dma.hbm_to_vmem [thread:$0]  %s358, 1024, %s360, %s350, 128, 64, 4
        $region48: #{tpu_custom_call.1} parent=39 // pred_fallthru
          _
      $region40: #{tpu_custom_call.1} parent=5 // pred_fallthru
        _
      %p366 = scmp.le.s32.totalorder 1, %s23
      %p367 = scmp.lt.s32.totalorder %s23, 5
      %p368 = pnand %p366, %p367
      %p369 = pneg %p368
      // Predicated region
      $region49: #{tpu_custom_call.1} parent=5 // pred_check
        _
      $region50: #{tpu_custom_call.1} parent=5 // pred_check_branch
        %371 = sbr.rel (%p368) target = $region52
      $region51: #{tpu_custom_call.1} parent=5 // pred_region
        %s372 = ssub.s32 %s23, 1
        %s373 = sand.u32 %s28, 1
        %s374 = scalar_lea.sflag [#allocation4], %s373
        %s375 = sand.u32 %s48, 1
        %s376 = smul.addr %s375, 4
        %s377 = scalar_lea.vmem [#allocation3], %s376
        // Predicated region
        $region53: #{tpu_custom_call.1} parent=51 // pred_check
          %p378 = pneg %p61
        $region54: #{tpu_custom_call.1} parent=51 // pred_check_branch
          %380 = sbr.rel (%p378) target = $region56
        $region55: #{tpu_custom_call.1} parent=51 // pred_region
          %381 = dma.done %s374, 64
        $region56: #{tpu_custom_call.1} parent=51 // pred_fallthru
          _
        // Predicated region
        $region57: #{tpu_custom_call.1} parent=51 // pred_check
          %p382 = pneg %p82
        $region58: #{tpu_custom_call.1} parent=51 // pred_check_branch
          %384 = sbr.rel (%p382) target = $region60
        $region59: #{tpu_custom_call.1} parent=51 // pred_region
          %385 = dma.done [#allocation7], 768
        $region60: #{tpu_custom_call.1} parent=51 // pred_fallthru
          _
        // Predicated region
        $region61: #{tpu_custom_call.1} parent=51 // pred_check
          %p386 = pneg %p103
        $region62: #{tpu_custom_call.1} parent=51 // pred_check_branch
          %388 = sbr.rel (%p386) target = $region64
        $region63: #{tpu_custom_call.1} parent=51 // pred_region
          %389 = dma.done [#allocation7], 3072
        $region64: #{tpu_custom_call.1} parent=51 // pred_fallthru
          _
        // Predicated region
        $region65: #{tpu_custom_call.1} parent=51 // pred_check
          %p390 = pneg %p124
        $region66: #{tpu_custom_call.1} parent=51 // pred_check_branch
          %392 = sbr.rel (%p390) target = $region68
        $region67: #{tpu_custom_call.1} parent=51 // pred_region
          %393 = dma.done [#allocation10], 3072
        $region68: #{tpu_custom_call.1} parent=51 // pred_fallthru
          _
        // Predicated region
        $region69: #{tpu_custom_call.1} parent=51 // pred_check
          %p394 = pneg %p145
        $region70: #{tpu_custom_call.1} parent=51 // pred_check_branch
          %396 = sbr.rel (%p394) target = $region72
        $region71: #{tpu_custom_call.1} parent=51 // pred_region
          %397 = dma.done [#allocation10], 1024
        $region72: #{tpu_custom_call.1} parent=51 // pred_fallthru
          _
        // Predicated region
        $region73: #{tpu_custom_call.1} parent=51 // pred_check
          %p398 = pneg %p187
        $region74: #{tpu_custom_call.1} parent=51 // pred_check_branch
          %400 = sbr.rel (%p398) target = $region76
        $region75: #{tpu_custom_call.1} parent=51 // pred_region
          %401 = dma.done [#allocation13], 256
        $region76: #{tpu_custom_call.1} parent=51 // pred_fallthru
          _
        %s402 = sand.u32 %s28, 1
        %s403 = scalar_lea.sflag [#allocation4], %s402
        %s404 = sand.u32 %s200, 1
        %s405 = smul.addr %s404, 64
        %s406 = scalar_lea.vmem [#allocation14], %s405
        // Predicated region
        $region77: #{tpu_custom_call.1} parent=51 // pred_check
          %p407 = pneg %p213
        $region78: #{tpu_custom_call.1} parent=51 // pred_check_branch
          %409 = sbr.rel (%p407) target = $region80
        $region79: #{tpu_custom_call.1} parent=51 // pred_region
          %410 = dma.done %s403, 1024
        $region80: #{tpu_custom_call.1} parent=51 // pred_fallthru
          _
        %s411 = sand.u32 %s28, 1
        %s412 = scalar_lea.sflag [#allocation4], %s411
        %s413 = sand.u32 %s48, 1
        %s414 = smul.addr %s413, 4
        %s415 = scalar_lea.vmem [#allocation3], %s414
        %p416 = pneg %p61
        %p417 = pneg %p58
        %p418 = pneg %p82
        %p419 = pneg %p79
        %p420 = pneg %p103
        %p421 = pneg %p100
        %p422 = pneg %p124
        %p423 = pneg %p121
        %p424 = pneg %p145
        %p425 = pneg %p142
        %p426 = pneg %p166
        %p427 = pneg %p163
        %p428 = pneg %p187
        %p429 = pneg %p184
        %s430 = sand.u32 %s28, 1
        %s431 = scalar_lea.sflag [#allocation4], %s430
        %s432 = sand.u32 %s200, 1
        %s433 = smul.addr %s432, 64
        %s434 = scalar_lea.vmem [#allocation14], %s433
        %p435 = pneg %p213
        %p436 = pneg %p210
        %p437 = pneg %p241
        %p438 = pneg %p238
        %s439 = sand.u32 %s228, 1
        %s440 = scalar_lea.sflag [#allocation5], %s439
        %s441 = sand.u32 %s228, 1
        %s442 = smul.addr %s441, 8
        %s443 = scalar_lea.vmem [#allocation15], %s442
        %p445 = scmp.eq.s32.totalorder %s33, 0
        // Predicated region
        $region81: #{tpu_custom_call.1} parent=51 // pred_check
          %p446 = pneg %p445
        $region82: #{tpu_custom_call.1} parent=51 // pred_check_branch
          %448 = sbr.rel (%p446) target = $region84
        $region83: #{tpu_custom_call.1} parent=51 // pred_region
          %v449 = vld [vmem:[%s377] sm:$0xf]
          %v450 = vunpack.c.l.bf16 %v449
          %v451 = vld [vmem:[#allocation6] sm:$0xff]
          %v452 = vld [vmem:[#allocation6 + $0x8] sm:$0xf]
          %v453 = vld [vmem:[#allocation6 + $0xc] sm:$0xff]
          %v454 = vld [vmem:[#allocation6 + $0x14] sm:$0xf]
          %v455 = vld [vmem:[#allocation6 + $0x18] sm:$0xff]
          %v456 = vld [vmem:[#allocation6 + $0x20] sm:$0xf]
          %v457 = vld [vmem:[#allocation6 + $0x24] sm:$0xff]
          %v458 = vld [vmem:[#allocation6 + $0x2c] sm:$0xf]
          %v459 = vld [vmem:[#allocation8] sm:$0xff]
          %v460 = vld [vmem:[#allocation8 + $0x8] sm:$0xf]
          %v461 = vld [vmem:[#allocation8 + $0xc] sm:$0xff]
          %v462 = vld [vmem:[#allocation8 + $0x14] sm:$0xf]
          %v463 = vld [vmem:[#allocation8 + $0x18] sm:$0xff]
          %v464 = vld [vmem:[#allocation8 + $0x20] sm:$0xf]
          %v465 = vld [vmem:[#allocation8 + $0x24] sm:$0xff]
          %v466 = vld [vmem:[#allocation8 + $0x2c] sm:$0xf]
          %v467 = vld [vmem:[#allocation8 + $0x30] sm:$0xff]
          %v468 = vld [vmem:[#allocation8 + $0x38] sm:$0xf]
          %v469 = vld [vmem:[#allocation8 + $0x3c] sm:$0xff]
          %v470 = vld [vmem:[#allocation8 + $0x44] sm:$0xf]
          %v471 = vld [vmem:[#allocation8 + $0x48] sm:$0xff]
          %v472 = vld [vmem:[#allocation8 + $0x50] sm:$0xf]
          %v473 = vld [vmem:[#allocation8 + $0x54] sm:$0xff]
          %v474 = vld [vmem:[#allocation8 + $0x5c] sm:$0xf]
          %v475 = vld [vmem:[#allocation8 + $0x60] sm:$0xff]
          %v476 = vld [vmem:[#allocation8 + $0x68] sm:$0xf]
          %v477 = vld [vmem:[#allocation8 + $0x6c] sm:$0xff]
          %v478 = vld [vmem:[#allocation8 + $0x74] sm:$0xf]
          %v479 = vld [vmem:[#allocation8 + $0x78] sm:$0xff]
          %v480 = vld [vmem:[#allocation8 + $0x80] sm:$0xf]
          %v481 = vld [vmem:[#allocation8 + $0x84] sm:$0xff]
          %v482 = vld [vmem:[#allocation8 + $0x8c] sm:$0xf]
          %v483 = vld [vmem:[#allocation8 + $0x90] sm:$0xff]
          %v484 = vld [vmem:[#allocation8 + $0x98] sm:$0xf]
          %v485 = vld [vmem:[#allocation8 + $0x9c] sm:$0xff]
          %v486 = vld [vmem:[#allocation8 + $0xa4] sm:$0xf]
          %v487 = vld [vmem:[#allocation8 + $0xa8] sm:$0xff]
          %v488 = vld [vmem:[#allocation8 + $0xb0] sm:$0xf]
          %v489 = vld [vmem:[#allocation8 + $0xb4] sm:$0xff]
          %v490 = vld [vmem:[#allocation8 + $0xbc] sm:$0xf]
          %v523 = vunpack.c.l.b16 %v459
          %v524 = vunpack.c.h.b16 %v459
          %v525 = vunpack.c.l.b16 %v460
          %v526 = vunpack.c.l.b16 %v461
          %v527 = vunpack.c.h.b16 %v461
          %v528 = vunpack.c.l.b16 %v462
          %v529 = vunpack.c.l.b16 %v463
          %v530 = vunpack.c.h.b16 %v463
          %v531 = vunpack.c.l.b16 %v464
          %v532 = vunpack.c.l.b16 %v465
          %v533 = vunpack.c.h.b16 %v465
          %v534 = vunpack.c.l.b16 %v466
          %v535 = vunpack.c.l.b16 %v467
          %v536 = vunpack.c.h.b16 %v467
          %v537 = vunpack.c.l.b16 %v468
          %v538 = vunpack.c.l.b16 %v469
          %v539 = vunpack.c.h.b16 %v469
          %v540 = vunpack.c.l.b16 %v470
          %v541 = vunpack.c.l.b16 %v471
          %v542 = vunpack.c.h.b16 %v471
          %v543 = vunpack.c.l.b16 %v472
          %v544 = vunpack.c.l.b16 %v473
          %v545 = vunpack.c.h.b16 %v473
          %v546 = vunpack.c.l.b16 %v474
          %v547 = vunpack.c.l.b16 %v475
          %v548 = vunpack.c.h.b16 %v475
          %v549 = vunpack.c.l.b16 %v476
          %v550 = vunpack.c.l.b16 %v477
          %v551 = vunpack.c.h.b16 %v477
          %v552 = vunpack.c.l.b16 %v478
          %v553 = vunpack.c.l.b16 %v479
          %v554 = vunpack.c.h.b16 %v479
          %v555 = vunpack.c.l.b16 %v480
          %v556 = vunpack.c.l.b16 %v481
          %v557 = vunpack.c.h.b16 %v481
          %v558 = vunpack.c.l.b16 %v482
          %v559 = vunpack.c.l.b16 %v483
          %v560 = vunpack.c.h.b16 %v483
          %v561 = vunpack.c.l.b16 %v484
          %v562 = vunpack.c.l.b16 %v485
          %v563 = vunpack.c.h.b16 %v485
          %v564 = vunpack.c.l.b16 %v486
          %v565 = vunpack.c.l.b16 %v487
          %v566 = vunpack.c.h.b16 %v487
          %v567 = vunpack.c.l.b16 %v488
          %v568 = vunpack.c.l.b16 %v489
          %v569 = vunpack.c.h.b16 %v489
          %v570 = vunpack.c.l.b16 %v490
          %v571 = vpack.c.b16 %v526, %v523
          %v572 = vpack.c.b16 %v527, %v524
          %v573 = vpack.c.b16 %v528, %v525
          %v574 = vpack.c.b16 %v532, %v529
          %v575 = vpack.c.b16 %v533, %v530
          %v576 = vpack.c.b16 %v534, %v531
          %v577 = vpack.c.b16 %v538, %v535
          %v578 = vpack.c.b16 %v539, %v536
          %v579 = vpack.c.b16 %v540, %v537
          %v580 = vpack.c.b16 %v544, %v541
          %v581 = vpack.c.b16 %v545, %v542
          %v582 = vpack.c.b16 %v546, %v543
          %v583 = vpack.c.b16 %v550, %v547
          %v584 = vpack.c.b16 %v551, %v548
          %v585 = vpack.c.b16 %v552, %v549
          %v586 = vpack.c.b16 %v556, %v553
          %v587 = vpack.c.b16 %v557, %v554
          %v588 = vpack.c.b16 %v558, %v555
          %v589 = vpack.c.b16 %v562, %v559
          %v590 = vpack.c.b16 %v563, %v560
          %v591 = vpack.c.b16 %v564, %v561
          %v592 = vpack.c.b16 %v568, %v565
          %v593 = vpack.c.b16 %v569, %v566
          %v594 = vpack.c.b16 %v570, %v567
          %619 = vmatprep.subr.bf16.mxu0 %v593
          %620 = vmatpush1.bf16.msra.mxu0 %v592
          %621 = vmatprep.subr.bf16.mxu0 %v590
          %622 = vmatpush1.bf16.msra.mxu0 %v589
          %623 = vmatprep.subr.bf16.mxu0 %v587
          %624 = vmatpush1.bf16.msra.mxu0 %v586
          %625 = vmatprep.subr.bf16.mxu0 %v584
          %626 = vmatpush1.bf16.msra.mxu0 %v583
          %627 = vmatprep.subr.bf16.mxu0 %v581
          %628 = vmatpush1.bf16.msra.mxu0 %v580
          %629 = vmatprep.subr.bf16.mxu0 %v578
          %630 = vmatpush1.bf16.msra.mxu0 %v577
          %631 = vmatprep.subr.bf16.mxu0 %v575
          %632 = vmatpush1.bf16.msra.mxu0 %v574
          %633 = vmatprep.subr.bf16.mxu0 %v572
          %634 = vmatpush1.bf16.msra.mxu0 %v571
          %635 = vmatprep.subr.bf16.mxu0 0
          %636 = vmatpush2.bf16.msra.mxu0 0
          %637 = vmatprep.subr.bf16.mxu0 0
          %638 = vmatpush2.bf16.msra.mxu0 0
          %639 = vmatprep.subr.bf16.mxu0 0
          %640 = vmatpush2.bf16.msra.mxu0 0
          %641 = vmatprep.subr.bf16.mxu0 0
          %642 = vmatpush2.bf16.msra.mxu0 0
          %643 = vmatprep.subr.bf16.mxu0 0
          %644 = vmatpush2.bf16.msra.mxu0 0
          %645 = vmatprep.subr.bf16.mxu0 0
          %646 = vmatpush2.bf16.msra.mxu0 0
          %647 = vmatprep.subr.bf16.mxu0 0
          %648 = vmatpush2.bf16.msra.mxu0 0
          %649 = vmatprep.subr.bf16.mxu0 0
          %650 = vmatpush2.bf16.msra.mxu0 0
          %651 = vmatprep.mubr.bf16.mxu0 0
          %652 = vmatmul.mubr.bf16.gmra.mxu0 %v449
          %v653 = vpop.f32.mrf.mxu0
          %v654 = vadd.f32 0.0, %v653
          %v655 = vpop.f32.mrf.mxu0
          %v656 = vadd.f32 0.0, %v655
          %v657 = vpop.f32.mrf.mxu0
          %v658 = vpop.f32.mrf.mxu0
          %659 = vdwg.mxu0
          %660 = vmatprep.subr.bf16.mxu0 0
          %661 = vmatpush1.bf16.msra.mxu0 %v594
          %662 = vmatprep.subr.bf16.mxu0 0
          %663 = vmatpush1.bf16.msra.mxu0 %v591
          %664 = vmatprep.subr.bf16.mxu0 0
          %665 = vmatpush1.bf16.msra.mxu0 %v588
          %666 = vmatprep.subr.bf16.mxu0 0
          %667 = vmatpush1.bf16.msra.mxu0 %v585
          %668 = vmatprep.subr.bf16.mxu0 0
          %669 = vmatpush1.bf16.msra.mxu0 %v582
          %670 = vmatprep.subr.bf16.mxu0 0
          %671 = vmatpush1.bf16.msra.mxu0 %v579
          %672 = vmatprep.subr.bf16.mxu0 0
          %673 = vmatpush1.bf16.msra.mxu0 %v576
          %674 = vmatprep.subr.bf16.mxu0 0
          %675 = vmatpush1.bf16.msra.mxu0 %v573
          %676 = vmatprep.subr.bf16.mxu0 0
          %677 = vmatpush2.bf16.msra.mxu0 0
          %678 = vmatprep.subr.bf16.mxu0 0
          %679 = vmatpush2.bf16.msra.mxu0 0
          %680 = vmatprep.subr.bf16.mxu0 0
          %681 = vmatpush2.bf16.msra.mxu0 0
          %682 = vmatprep.subr.bf16.mxu0 0
          %683 = vmatpush2.bf16.msra.mxu0 0
          %684 = vmatprep.subr.bf16.mxu0 0
          %685 = vmatpush2.bf16.msra.mxu0 0
          %686 = vmatprep.subr.bf16.mxu0 0
          %687 = vmatpush2.bf16.msra.mxu0 0
          %688 = vmatprep.subr.bf16.mxu0 0
          %689 = vmatpush2.bf16.msra.mxu0 0
          %690 = vmatprep.subr.bf16.mxu0 0
          %691 = vmatpush2.bf16.msra.mxu0 0
          %692 = vmatprep.mubr.bf16.mxu0 0
          %693 = vmatmul.mubr.bf16.gmra.mxu0 %v449
          %v694 = vpop.f32.mrf.mxu0
          %v695 = vadd.f32 0.0, %v694
          %v696 = vpop.f32.mrf.mxu0
          %v697 = vpop.f32.mrf.mxu0
          %v698 = vpop.f32.mrf.mxu0
          %699 = vdwg.mxu0
          %v700 = vpack.c.bf16 %v654, %v654
          %v701 = vpack.c.bf16 %v656, %v656
          %v702 = vpack.c.bf16 %v695, %v695
          %v711 = vunpack.c.l.b16 %v451
          %v712 = vunpack.c.h.b16 %v451
          %v713 = vunpack.c.l.b16 %v452
          %v714 = vunpack.c.l.b16 %v453
          %v715 = vunpack.c.h.b16 %v453
          %v716 = vunpack.c.l.b16 %v454
          %v717 = vunpack.c.l.b16 %v455
          %v718 = vunpack.c.h.b16 %v455
          %v719 = vunpack.c.l.b16 %v456
          %v720 = vunpack.c.l.b16 %v457
          %v721 = vunpack.c.h.b16 %v457
          %v722 = vunpack.c.l.b16 %v458
          %v723 = vpack.c.b16 %v714, %v711
          %v724 = vpack.c.b16 %v715, %v712
          %v725 = vpack.c.b16 %v716, %v713
          %v726 = vpack.c.b16 %v720, %v717
          %v727 = vpack.c.b16 %v721, %v718
          %v728 = vpack.c.b16 %v722, %v719
          %735 = vmatprep.subr.bf16.mxu0 0
          %736 = vmatpush1.bf16.xpose.msra.mxu0 0
          %737 = vmatprep.subr.bf16.mxu0 0
          %738 = vmatpush1.bf16.xpose.msra.mxu0 0
          %739 = vmatprep.subr.bf16.mxu0 0
          %740 = vmatpush1.bf16.xpose.msra.mxu0 0
          %741 = vmatprep.subr.bf16.mxu0 0
          %742 = vmatpush1.bf16.xpose.msra.mxu0 0
          %743 = vmatprep.subr.bf16.mxu0 0
          %744 = vmatpush1.bf16.xpose.msra.mxu0 0
          %745 = vmatprep.subr.bf16.mxu0 0
          %746 = vmatpush1.bf16.xpose.msra.mxu0 0
          %747 = vmatprep.subr.bf16.mxu0 %v727
          %748 = vmatpush1.bf16.xpose.msra.mxu0 %v726
          %749 = vmatprep.subr.bf16.mxu0 %v724
          %750 = vmatpush1.bf16.xpose.msra.mxu0 %v723
          %751 = vmatprep.subr.bf16.mxu0 0
          %752 = vmatpush2.bf16.xpose.msra.mxu0 0
          %753 = vmatprep.subr.bf16.mxu0 0
          %754 = vmatpush2.bf16.xpose.msra.mxu0 0
          %755 = vmatprep.subr.bf16.mxu0 0
          %756 = vmatpush2.bf16.xpose.msra.mxu0 0
          %757 = vmatprep.subr.bf16.mxu0 0
          %758 = vmatpush2.bf16.xpose.msra.mxu0 0
          %759 = vmatprep.subr.bf16.mxu0 0
          %760 = vmatpush2.bf16.xpose.msra.mxu0 0
          %761 = vmatprep.subr.bf16.mxu0 0
          %762 = vmatpush2.bf16.xpose.msra.mxu0 0
          %763 = vmatprep.subr.bf16.mxu0 0
          %764 = vmatpush2.bf16.xpose.msra.mxu0 0
          %765 = vmatprep.subr.bf16.mxu0 0
          %766 = vmatpush2.bf16.xpose.msra.mxu0 0
          %767 = vmatprep.mubr.bf16.mxu0 %v701
          %768 = vmatmul.mubr.bf16.gmra.mxu0 %v700
          %v769 = vpop.f32.mrf.mxu0
          %v770 = vadd.f32 0.0, %v769
          %v771 = vpop.f32.mrf.mxu0
          %v772 = vpop.f32.mrf.mxu0
          %v773 = vpop.f32.mrf.mxu0
          %774 = vdwg.mxu0
          %775 = vmatprep.subr.bf16.mxu0 0
          %776 = vmatpush1.bf16.xpose.msra.mxu0 0
          %777 = vmatprep.subr.bf16.mxu0 0
          %778 = vmatpush1.bf16.xpose.msra.mxu0 0
          %779 = vmatprep.subr.bf16.mxu0 0
          %780 = vmatpush1.bf16.xpose.msra.mxu0 0
          %781 = vmatprep.subr.bf16.mxu0 0
          %782 = vmatpush1.bf16.xpose.msra.mxu0 0
          %783 = vmatprep.subr.bf16.mxu0 0
          %784 = vmatpush1.bf16.xpose.msra.mxu0 0
          %785 = vmatprep.subr.bf16.mxu0 0
          %786 = vmatpush1.bf16.xpose.msra.mxu0 0
          %787 = vmatprep.subr.bf16.mxu0 0
          %788 = vmatpush1.bf16.xpose.msra.mxu0 %v728
          %789 = vmatprep.subr.bf16.mxu0 0
          %790 = vmatpush1.bf16.xpose.msra.mxu0 %v725
          %791 = vmatprep.subr.bf16.mxu0 0
          %792 = vmatpush2.bf16.xpose.msra.mxu0 0
          %793 = vmatprep.subr.bf16.mxu0 0
          %794 = vmatpush2.bf16.xpose.msra.mxu0 0
          %795 = vmatprep.subr.bf16.mxu0 0
          %796 = vmatpush2.bf16.xpose.msra.mxu0 0
          %797 = vmatprep.subr.bf16.mxu0 0
          %798 = vmatpush2.bf16.xpose.msra.mxu0 0
          %799 = vmatprep.subr.bf16.mxu0 0
          %800 = vmatpush2.bf16.xpose.msra.mxu0 0
          %801 = vmatprep.subr.bf16.mxu0 0
          %802 = vmatpush2.bf16.xpose.msra.mxu0 0
          %803 = vmatprep.subr.bf16.mxu0 0
          %804 = vmatpush2.bf16.xpose.msra.mxu0 0
          %805 = vmatprep.subr.bf16.mxu0 0
          %806 = vmatpush2.bf16.xpose.msra.mxu0 0
          %807 = vmatprep.mubr.bf16.mxu0 0
          %808 = vmatmul.mubr.bf16.gmra.mxu0 %v702
          %v809 = vpop.f32.mrf.mxu0
          %v810 = vadd.f32 %v770, %v809
          %v811 = vpop.f32.mrf.mxu0
          %v812 = vpop.f32.mrf.mxu0
          %v813 = vpop.f32.mrf.mxu0
          %814 = vdwg.mxu0
          %vm815 = vcmask 261120
          %v816 = vsel %vm815, %v810, -inf
          %817 = vmax.xlane.f32.xlu0 %v816
          %v818 = vpop.xlane.xlu0 %817
          %v819 = vsub.f32 %v810, %v818
          %v820 = vmul.f32 %v819, 1.442695
          %v821 = vpow.pop %v820
          %v822 = vpack.c.bf16 %v821, %v821
          %v823 = vld [vmem:[#allocation12] sm:$0xf]
          %v824 = vld [vmem:[#allocation12 + $0x4] sm:$0xf]
          %v825 = vld [vmem:[#allocation12 + $0x8] sm:$0xf]
          %v826 = vld [vmem:[#allocation12 + $0xc] sm:$0xf]
          %v831 = vunpack.c.l.b16 %v823
          %v832 = vunpack.c.l.b16 %v824
          %v833 = vunpack.c.l.b16 %v825
          %v834 = vunpack.c.l.b16 %v826
          %v835 = vpack.c.b16 %v832, %v831
          %v836 = vpack.c.b16 %v834, %v833
          %v840 = vsel %vm815, %v822, 0
          %842 = vmatprep.subr.bf16.mxu0 0
          %843 = vmatpush1.bf16.msra.mxu0 0
          %844 = vmatprep.subr.bf16.mxu0 0
          %845 = vmatpush1.bf16.msra.mxu0 0
          %846 = vmatprep.subr.bf16.mxu0 0
          %847 = vmatpush1.bf16.msra.mxu0 0
          %848 = vmatprep.subr.bf16.mxu0 0
          %849 = vmatpush1.bf16.msra.mxu0 0
          %850 = vmatprep.subr.bf16.mxu0 0
          %851 = vmatpush1.bf16.msra.mxu0 0
          %852 = vmatprep.subr.bf16.mxu0 0
          %853 = vmatpush1.bf16.msra.mxu0 0
          %854 = vmatprep.subr.bf16.mxu0 0
          %855 = vmatpush1.bf16.msra.mxu0 %v836
          %856 = vmatprep.subr.bf16.mxu0 0
          %857 = vmatpush1.bf16.msra.mxu0 %v835
          %858 = vmatprep.subr.bf16.mxu0 0
          %859 = vmatpush2.bf16.msra.mxu0 0
          %860 = vmatprep.subr.bf16.mxu0 0
          %861 = vmatpush2.bf16.msra.mxu0 0
          %862 = vmatprep.subr.bf16.mxu0 0
          %863 = vmatpush2.bf16.msra.mxu0 0
          %864 = vmatprep.subr.bf16.mxu0 0
          %865 = vmatpush2.bf16.msra.mxu0 0
          %866 = vmatprep.subr.bf16.mxu0 0
          %867 = vmatpush2.bf16.msra.mxu0 0
          %868 = vmatprep.subr.bf16.mxu0 0
          %869 = vmatpush2.bf16.msra.mxu0 0
          %870 = vmatprep.subr.bf16.mxu0 0
          %871 = vmatpush2.bf16.msra.mxu0 0
          %872 = vmatprep.subr.bf16.mxu0 0
          %873 = vmatpush2.bf16.msra.mxu0 0
          %874 = vmatprep.mubr.bf16.mxu0 0
          %875 = vmatmul.mubr.bf16.gmra.mxu0 %v840
          %v876 = vpop.f32.mrf.mxu0
          %v877 = vadd.f32 0.0, %v876
          %v878 = vpop.f32.mrf.mxu0
          %v879 = vpop.f32.mrf.mxu0
          %v880 = vpop.f32.mrf.mxu0
          %881 = vdwg.mxu0
          %v882 = vrcp.pop %v877
          %v883 = vmul.f32 %v821, %v882
          %v884 = vpack.c.bf16 %v883, %v883
          %v886 = vsel %vm815, %v884, 0
          %888 = vmatprep.subr.bf16.mxu0 0
          %889 = vmatpush1.bf16.msra.mxu0 0
          %890 = vmatprep.subr.bf16.mxu0 0
          %891 = vmatpush1.bf16.msra.mxu0 0
          %892 = vmatprep.subr.bf16.mxu0 0
          %893 = vmatpush1.bf16.msra.mxu0 0
          %894 = vmatprep.subr.bf16.mxu0 0
          %895 = vmatpush1.bf16.msra.mxu0 0
          %896 = vmatprep.subr.bf16.mxu0 0
          %897 = vmatpush1.bf16.msra.mxu0 0
          %898 = vmatprep.subr.bf16.mxu0 0
          %899 = vmatpush1.bf16.msra.mxu0 0
          %900 = vmatprep.subr.bf16.mxu0 %v727
          %901 = vmatpush1.bf16.msra.mxu0 %v726
          %902 = vmatprep.subr.bf16.mxu0 %v724
          %903 = vmatpush1.bf16.msra.mxu0 %v723
          %904 = vmatprep.subr.bf16.mxu0 0
          %905 = vmatpush2.bf16.msra.mxu0 0
          %906 = vmatprep.subr.bf16.mxu0 0
          %907 = vmatpush2.bf16.msra.mxu0 0
          %908 = vmatprep.subr.bf16.mxu0 0
          %909 = vmatpush2.bf16.msra.mxu0 0
          %910 = vmatprep.subr.bf16.mxu0 0
          %911 = vmatpush2.bf16.msra.mxu0 0
          %912 = vmatprep.subr.bf16.mxu0 0
          %913 = vmatpush2.bf16.msra.mxu0 0
          %914 = vmatprep.subr.bf16.mxu0 0
          %915 = vmatpush2.bf16.msra.mxu0 0
          %916 = vmatprep.subr.bf16.mxu0 0
          %917 = vmatpush2.bf16.msra.mxu0 0
          %918 = vmatprep.subr.bf16.mxu0 0
          %919 = vmatpush2.bf16.msra.mxu0 0
          %920 = vmatprep.mubr.bf16.mxu0 0
          %921 = vmatmul.mubr.bf16.gmra.mxu0 %v886
          %v922 = vpop.f32.mrf.mxu0
          %v923 = vadd.f32 0.0, %v922
          %v924 = vpop.f32.mrf.mxu0
          %v925 = vadd.f32 0.0, %v924
          %v926 = vpop.f32.mrf.mxu0
          %v927 = vpop.f32.mrf.mxu0
          %928 = vdwg.mxu0
          %929 = vmatprep.subr.bf16.mxu0 0
          %930 = vmatpush1.bf16.msra.mxu0 0
          %931 = vmatprep.subr.bf16.mxu0 0
          %932 = vmatpush1.bf16.msra.mxu0 0
          %933 = vmatprep.subr.bf16.mxu0 0
          %934 = vmatpush1.bf16.msra.mxu0 0
          %935 = vmatprep.subr.bf16.mxu0 0
          %936 = vmatpush1.bf16.msra.mxu0 0
          %937 = vmatprep.subr.bf16.mxu0 0
          %938 = vmatpush1.bf16.msra.mxu0 0
          %939 = vmatprep.subr.bf16.mxu0 0
          %940 = vmatpush1.bf16.msra.mxu0 0
          %941 = vmatprep.subr.bf16.mxu0 0
          %942 = vmatpush1.bf16.msra.mxu0 %v728
          %943 = vmatprep.subr.bf16.mxu0 0
          %944 = vmatpush1.bf16.msra.mxu0 %v725
          %945 = vmatprep.subr.bf16.mxu0 0
          %946 = vmatpush2.bf16.msra.mxu0 0
          %947 = vmatprep.subr.bf16.mxu0 0
          %948 = vmatpush2.bf16.msra.mxu0 0
          %949 = vmatprep.subr.bf16.mxu0 0
          %950 = vmatpush2.bf16.msra.mxu0 0
          %951 = vmatprep.subr.bf16.mxu0 0
          %952 = vmatpush2.bf16.msra.mxu0 0
          %953 = vmatprep.subr.bf16.mxu0 0
          %954 = vmatpush2.bf16.msra.mxu0 0
          %955 = vmatprep.subr.bf16.mxu0 0
          %956 = vmatpush2.bf16.msra.mxu0 0
          %957 = vmatprep.subr.bf16.mxu0 0
          %958 = vmatpush2.bf16.msra.mxu0 0
          %959 = vmatprep.subr.bf16.mxu0 0
          %960 = vmatpush2.bf16.msra.mxu0 0
          %961 = vmatprep.mubr.bf16.mxu0 0
          %962 = vmatmul.mubr.bf16.gmra.mxu0 %v886
          %v963 = vpop.f32.mrf.mxu0
          %v964 = vadd.f32 0.0, %v963
          %v965 = vpop.f32.mrf.mxu0
          %v966 = vpop.f32.mrf.mxu0
          %v967 = vpop.f32.mrf.mxu0
          %968 = vdwg.mxu0
          %v969 = vpack.c.bf16 %v923, %v923
          %v970 = vpack.c.bf16 %v925, %v925
          %v971 = vpack.c.bf16 %v964, %v964
          %v972 = vld [vmem:[%s5] sm:$0x1]
          %v973 = vld [vmem:[%s5 + $0x1] sm:$0x1]
          %v974 = vld [vmem:[%s5 + $0x2] sm:$0x1]
          %v975 = vld [vmem:[%s5 + $0x3] sm:$0x1]
          %v976 = vld [vmem:[#allocation9] sm:$0xf]
          %v977 = vld [vmem:[#allocation9 + $0x4] sm:$0xf]
          %v978 = vld [vmem:[#allocation9 + $0x8] sm:$0xf]
          %v979 = vld [vmem:[#allocation9 + $0xc] sm:$0xf]
          %v980 = vld [vmem:[#allocation9 + $0x10] sm:$0xf]
          %v981 = vld [vmem:[#allocation9 + $0x14] sm:$0xf]
          %v982 = vld [vmem:[#allocation9 + $0x18] sm:$0xf]
          %v983 = vld [vmem:[#allocation9 + $0x1c] sm:$0xf]
          %v984 = vld [vmem:[#allocation9 + $0x20] sm:$0xf]
          %v985 = vld [vmem:[#allocation9 + $0x24] sm:$0xf]
          %v986 = vld [vmem:[#allocation9 + $0x28] sm:$0xf]
          %v987 = vld [vmem:[#allocation9 + $0x2c] sm:$0xf]
          %v988 = vld [vmem:[#allocation9 + $0x30] sm:$0xf]
          %v989 = vld [vmem:[#allocation9 + $0x34] sm:$0xf]
          %v990 = vld [vmem:[#allocation9 + $0x38] sm:$0xf]
          %v991 = vld [vmem:[#allocation9 + $0x3c] sm:$0xf]
          %v992 = vld [vmem:[#allocation9 + $0x40] sm:$0xf]
          %v993 = vld [vmem:[#allocation9 + $0x44] sm:$0xf]
          %v994 = vld [vmem:[#allocation9 + $0x48] sm:$0xf]
          %v995 = vld [vmem:[#allocation9 + $0x4c] sm:$0xf]
          %v996 = vld [vmem:[#allocation9 + $0x50] sm:$0xf]
          %v997 = vld [vmem:[#allocation9 + $0x54] sm:$0xf]
          %v998 = vld [vmem:[#allocation9 + $0x58] sm:$0xf]
          %v999 = vld [vmem:[#allocation9 + $0x5c] sm:$0xf]
          %v1000 = vld [vmem:[#allocation9 + $0x60] sm:$0xf]
          %v1001 = vld [vmem:[#allocation9 + $0x64] sm:$0xf]
          %v1002 = vld [vmem:[#allocation9 + $0x68] sm:$0xf]
          %v1003 = vld [vmem:[#allocation9 + $0x6c] sm:$0xf]
          %v1004 = vld [vmem:[#allocation9 + $0x70] sm:$0xf]
          %v1005 = vld [vmem:[#allocation9 + $0x74] sm:$0xf]
          %v1006 = vld [vmem:[#allocation9 + $0x78] sm:$0xf]
          %v1007 = vld [vmem:[#allocation9 + $0x7c] sm:$0xf]
          %v1008 = vld [vmem:[#allocation9 + $0x80] sm:$0xf]
          %v1009 = vld [vmem:[#allocation9 + $0x84] sm:$0xf]
          %v1010 = vld [vmem:[#allocation9 + $0x88] sm:$0xf]
          %v1011 = vld [vmem:[#allocation9 + $0x8c] sm:$0xf]
          %v1012 = vld [vmem:[#allocation9 + $0x90] sm:$0xf]
          %v1013 = vld [vmem:[#allocation9 + $0x94] sm:$0xf]
          %v1014 = vld [vmem:[#allocation9 + $0x98] sm:$0xf]
          %v1015 = vld [vmem:[#allocation9 + $0x9c] sm:$0xf]
          %v1016 = vld [vmem:[#allocation9 + $0xa0] sm:$0xf]
          %v1017 = vld [vmem:[#allocation9 + $0xa4] sm:$0xf]
          %v1018 = vld [vmem:[#allocation9 + $0xa8] sm:$0xf]
          %v1019 = vld [vmem:[#allocation9 + $0xac] sm:$0xf]
          %v1020 = vld [vmem:[#allocation9 + $0xb0] sm:$0xf]
          %v1021 = vld [vmem:[#allocation9 + $0xb4] sm:$0xf]
          %v1022 = vld [vmem:[#allocation9 + $0xb8] sm:$0xf]
          %v1023 = vld [vmem:[#allocation9 + $0xbc] sm:$0xf]
          %v1024 = vlaneseq
          %v1025 = vshrl.u32 %v1024, 7
          %v1026 = vsub.s32 0, %v1025
          %v1027 = vrot.slane %v972, %v1026
          %v1076 = vunpack.c.l.b16 %v976
          %v1077 = vunpack.c.l.b16 %v977
          %v1078 = vunpack.c.l.b16 %v978
          %v1079 = vunpack.c.l.b16 %v979
          %v1080 = vunpack.c.l.b16 %v980
          %v1081 = vunpack.c.l.b16 %v981
          %v1082 = vunpack.c.l.b16 %v982
          %v1083 = vunpack.c.l.b16 %v983
          %v1084 = vunpack.c.l.b16 %v984
          %v1085 = vunpack.c.l.b16 %v985
          %v1086 = vunpack.c.l.b16 %v986
          %v1087 = vunpack.c.l.b16 %v987
          %v1088 = vunpack.c.l.b16 %v988
          %v1089 = vunpack.c.l.b16 %v989
          %v1090 = vunpack.c.l.b16 %v990
          %v1091 = vunpack.c.l.b16 %v991
          %v1092 = vunpack.c.l.b16 %v992
          %v1093 = vunpack.c.l.b16 %v993
          %v1094 = vunpack.c.l.b16 %v994
          %v1095 = vunpack.c.l.b16 %v995
          %v1096 = vunpack.c.l.b16 %v996
          %v1097 = vunpack.c.l.b16 %v997
          %v1098 = vunpack.c.l.b16 %v998
          %v1099 = vunpack.c.l.b16 %v999
          %v1100 = vunpack.c.l.b16 %v1000
          %v1101 = vunpack.c.l.b16 %v1001
          %v1102 = vunpack.c.l.b16 %v1002
          %v1103 = vunpack.c.l.b16 %v1003
          %v1104 = vunpack.c.l.b16 %v1004
          %v1105 = vunpack.c.l.b16 %v1005
          %v1106 = vunpack.c.l.b16 %v1006
          %v1107 = vunpack.c.l.b16 %v1007
          %v1108 = vunpack.c.l.b16 %v1008
          %v1109 = vunpack.c.l.b16 %v1009
          %v1110 = vunpack.c.l.b16 %v1010
          %v1111 = vunpack.c.l.b16 %v1011
          %v1112 = vunpack.c.l.b16 %v1012
          %v1113 = vunpack.c.l.b16 %v1013
          %v1114 = vunpack.c.l.b16 %v1014
          %v1115 = vunpack.c.l.b16 %v1015
          %v1116 = vunpack.c.l.b16 %v1016
          %v1117 = vunpack.c.l.b16 %v1017
          %v1118 = vunpack.c.l.b16 %v1018
          %v1119 = vunpack.c.l.b16 %v1019
          %v1120 = vunpack.c.l.b16 %v1020
          %v1121 = vunpack.c.l.b16 %v1021
          %v1122 = vunpack.c.l.b16 %v1022
          %v1123 = vunpack.c.l.b16 %v1023
          %v1124 = vpack.c.b16 %v1077, %v1076
          %v1125 = vpack.c.b16 %v1079, %v1078
          %v1126 = vpack.c.b16 %v1081, %v1080
          %v1127 = vpack.c.b16 %v1083, %v1082
          %v1128 = vpack.c.b16 %v1085, %v1084
          %v1129 = vpack.c.b16 %v1087, %v1086
          %v1130 = vpack.c.b16 %v1089, %v1088
          %v1131 = vpack.c.b16 %v1091, %v1090
          %v1132 = vpack.c.b16 %v1093, %v1092
          %v1133 = vpack.c.b16 %v1095, %v1094
          %v1134 = vpack.c.b16 %v1097, %v1096
          %v1135 = vpack.c.b16 %v1099, %v1098
          %v1136 = vpack.c.b16 %v1101, %v1100
          %v1137 = vpack.c.b16 %v1103, %v1102
          %v1138 = vpack.c.b16 %v1105, %v1104
          %v1139 = vpack.c.b16 %v1107, %v1106
          %v1140 = vpack.c.b16 %v1109, %v1108
          %v1141 = vpack.c.b16 %v1111, %v1110
          %v1142 = vpack.c.b16 %v1113, %v1112
          %v1143 = vpack.c.b16 %v1115, %v1114
          %v1144 = vpack.c.b16 %v1117, %v1116
          %v1145 = vpack.c.b16 %v1119, %v1118
          %v1146 = vpack.c.b16 %v1121, %v1120
          %v1147 = vpack.c.b16 %v1123, %v1122
          %1172 = vmatprep.subr.bf16.mxu0 0
          %1173 = vmatpush1.bf16.msra.mxu0 %v1131
          %1174 = vmatprep.subr.bf16.mxu0 0
          %1175 = vmatpush1.bf16.msra.mxu0 %v1130
          %1176 = vmatprep.subr.bf16.mxu0 0
          %1177 = vmatpush1.bf16.msra.mxu0 %v1129
          %1178 = vmatprep.subr.bf16.mxu0 0
          %1179 = vmatpush1.bf16.msra.mxu0 %v1128
          %1180 = vmatprep.subr.bf16.mxu0 0
          %1181 = vmatpush1.bf16.msra.mxu0 %v1127
          %1182 = vmatprep.subr.bf16.mxu0 0
          %1183 = vmatpush1.bf16.msra.mxu0 %v1126
          %1184 = vmatprep.subr.bf16.mxu0 0
          %1185 = vmatpush1.bf16.msra.mxu0 %v1125
          %1186 = vmatprep.subr.bf16.mxu0 0
          %1187 = vmatpush1.bf16.msra.mxu0 %v1124
          %1188 = vmatprep.subr.bf16.mxu0 0
          %1189 = vmatpush2.bf16.msra.mxu0 %v1139
          %1190 = vmatprep.subr.bf16.mxu0 0
          %1191 = vmatpush2.bf16.msra.mxu0 %v1138
          %1192 = vmatprep.subr.bf16.mxu0 0
          %1193 = vmatpush2.bf16.msra.mxu0 %v1137
          %1194 = vmatprep.subr.bf16.mxu0 0
          %1195 = vmatpush2.bf16.msra.mxu0 %v1136
          %1196 = vmatprep.subr.bf16.mxu0 0
          %1197 = vmatpush2.bf16.msra.mxu0 %v1135
          %1198 = vmatprep.subr.bf16.mxu0 0
          %1199 = vmatpush2.bf16.msra.mxu0 %v1134
          %1200 = vmatprep.subr.bf16.mxu0 0
          %1201 = vmatpush2.bf16.msra.mxu0 %v1133
          %1202 = vmatprep.subr.bf16.mxu0 0
          %1203 = vmatpush2.bf16.msra.mxu0 %v1132
          %1204 = vmatprep.mubr.bf16.mxu0 %v970
          %1205 = vmatmul.mubr.bf16.gmra.mxu0 %v969
          %v1206 = vpop.f32.mrf.mxu0
          %v1207 = vadd.f32 %v1027, %v1206
          %v1208 = vpop.f32.mrf.mxu0
          %v1209 = vpop.f32.mrf.mxu0
          %v1210 = vpop.f32.mrf.mxu0
          %1211 = vdwg.mxu0
          %1212 = vmatprep.subr.bf16.mxu0 0
          %1213 = vmatpush1.bf16.msra.mxu0 %v1147
          %1214 = vmatprep.subr.bf16.mxu0 0
          %1215 = vmatpush1.bf16.msra.mxu0 %v1146
          %1216 = vmatprep.subr.bf16.mxu0 0
          %1217 = vmatpush1.bf16.msra.mxu0 %v1145
          %1218 = vmatprep.subr.bf16.mxu0 0
          %1219 = vmatpush1.bf16.msra.mxu0 %v1144
          %1220 = vmatprep.subr.bf16.mxu0 0
          %1221 = vmatpush1.bf16.msra.mxu0 %v1143
          %1222 = vmatprep.subr.bf16.mxu0 0
          %1223 = vmatpush1.bf16.msra.mxu0 %v1142
          %1224 = vmatprep.subr.bf16.mxu0 0
          %1225 = vmatpush1.bf16.msra.mxu0 %v1141
          %1226 = vmatprep.subr.bf16.mxu0 0
          %1227 = vmatpush1.bf16.msra.mxu0 %v1140
          %1228 = vmatprep.subr.bf16.mxu0 0
          %1229 = vmatpush2.bf16.msra.mxu0 0
          %1230 = vmatprep.subr.bf16.mxu0 0
          %1231 = vmatpush2.bf16.msra.mxu0 0
          %1232 = vmatprep.subr.bf16.mxu0 0
          %1233 = vmatpush2.bf16.msra.mxu0 0
          %1234 = vmatprep.subr.bf16.mxu0 0
          %1235 = vmatpush2.bf16.msra.mxu0 0
          %1236 = vmatprep.subr.bf16.mxu0 0
          %1237 = vmatpush2.bf16.msra.mxu0 0
          %1238 = vmatprep.subr.bf16.mxu0 0
          %1239 = vmatpush2.bf16.msra.mxu0 0
          %1240 = vmatprep.subr.bf16.mxu0 0
          %1241 = vmatpush2.bf16.msra.mxu0 0
          %1242 = vmatprep.subr.bf16.mxu0 0
          %1243 = vmatpush2.bf16.msra.mxu0 0
          %1244 = vmatprep.mubr.bf16.mxu0 0
          %1245 = vmatmul.mubr.bf16.gmra.mxu0 %v971
          %v1246 = vpop.f32.mrf.mxu0
          %v1247 = vadd.f32 %v1207, %v1246
          %v1248 = vpop.f32.mrf.mxu0
          %v1249 = vpop.f32.mrf.mxu0
          %v1250 = vpop.f32.mrf.mxu0
          %1251 = vdwg.mxu0
          %v1252 = vadd.f32 %v1247, %v450
          %1253 = vadd.xlane.f32.xlu0 %v1252
          %v1254 = vpop.xlane.xlu0 %1253
          %v1255 = vmul.f32 %v1254, 0.03125
          %v1256 = vmul.f32 %v1252, %v1252
          %1257 = vadd.xlane.f32.xlu0 %v1256
          %v1258 = vpop.xlane.xlu0 %1257
          %v1259 = vmul.f32 %v1258, 0.03125
          %v1260 = vmul.f32 %v1255, %v1255
          %v1261 = vsub.f32 %v1259, %v1260
          %v1262 = vsub.f32 %v1252, %v1255
          %v1263 = vadd.f32 %v1261, 1e-05
          %v1264 = vrsqrt.pop %v1263
          %v1265 = vmul.f32 %v1262, %v1264
          %v1266 = vlaneseq
          %v1267 = vshrl.u32 %v1266, 7
          %v1268 = vsub.s32 0, %v1267
          %v1269 = vrot.slane %v974, %v1268
          %v1270 = vmul.f32 %v1265, %v1269
          %v1271 = vlaneseq
          %v1272 = vshrl.u32 %v1271, 7
          %v1273 = vsub.s32 0, %v1272
          %v1274 = vrot.slane %v975, %v1273
          %v1275 = vadd.f32 %v1270, %v1274
          %v1276 = vpack.c.bf16 %v1275, %v1275
          %v1277 = vld [vmem:[#allocation11] sm:$0xf]
          %v1278 = vld [vmem:[#allocation11 + $0x4] sm:$0xf]
          %v1279 = vld [vmem:[#allocation11 + $0x8] sm:$0xf]
          %v1280 = vld [vmem:[#allocation11 + $0xc] sm:$0xf]
          %v1281 = vld [vmem:[#allocation11 + $0x10] sm:$0xf]
          %v1282 = vld [vmem:[#allocation11 + $0x14] sm:$0xf]
          %v1283 = vld [vmem:[#allocation11 + $0x18] sm:$0xf]
          %v1284 = vld [vmem:[#allocation11 + $0x1c] sm:$0xf]
          %v1285 = vld [vmem:[#allocation11 + $0x20] sm:$0xf]
          %v1286 = vld [vmem:[#allocation11 + $0x24] sm:$0xf]
          %v1287 = vld [vmem:[#allocation11 + $0x28] sm:$0xf]
          %v1288 = vld [vmem:[#allocation11 + $0x2c] sm:$0xf]
          %v1289 = vld [vmem:[#allocation11 + $0x30] sm:$0xf]
          %v1290 = vld [vmem:[#allocation11 + $0x34] sm:$0xf]
          %v1291 = vld [vmem:[#allocation11 + $0x38] sm:$0xf]
          %v1292 = vld [vmem:[#allocation11 + $0x3c] sm:$0xf]
          %v1293 = vlaneseq
          %v1294 = vshrl.u32 %v1293, 7
          %v1295 = vsub.s32 0, %v1294
          %v1296 = vrot.slane %v973, %v1295
          %v1313 = vunpack.c.l.b16 %v1277
          %v1314 = vunpack.c.l.b16 %v1278
          %v1315 = vunpack.c.l.b16 %v1279
          %v1316 = vunpack.c.l.b16 %v1280
          %v1317 = vunpack.c.l.b16 %v1281
          %v1318 = vunpack.c.l.b16 %v1282
          %v1319 = vunpack.c.l.b16 %v1283
          %v1320 = vunpack.c.l.b16 %v1284
          %v1321 = vunpack.c.l.b16 %v1285
          %v1322 = vunpack.c.l.b16 %v1286
          %v1323 = vunpack.c.l.b16 %v1287
          %v1324 = vunpack.c.l.b16 %v1288
          %v1325 = vunpack.c.l.b16 %v1289
          %v1326 = vunpack.c.l.b16 %v1290
          %v1327 = vunpack.c.l.b16 %v1291
          %v1328 = vunpack.c.l.b16 %v1292
          %v1329 = vpack.c.b16 %v1314, %v1313
          %v1330 = vpack.c.b16 %v1316, %v1315
          %v1331 = vpack.c.b16 %v1318, %v1317
          %v1332 = vpack.c.b16 %v1320, %v1319
          %v1333 = vpack.c.b16 %v1322, %v1321
          %v1334 = vpack.c.b16 %v1324, %v1323
          %v1335 = vpack.c.b16 %v1326, %v1325
          %v1336 = vpack.c.b16 %v1328, %v1327
          %1345 = vmatprep.subr.bf16.mxu0 0
          %1346 = vmatpush1.bf16.msra.mxu0 %v1336
          %1347 = vmatprep.subr.bf16.mxu0 0
          %1348 = vmatpush1.bf16.msra.mxu0 %v1335
          %1349 = vmatprep.subr.bf16.mxu0 0
          %1350 = vmatpush1.bf16.msra.mxu0 %v1334
          %1351 = vmatprep.subr.bf16.mxu0 0
          %1352 = vmatpush1.bf16.msra.mxu0 %v1333
          %1353 = vmatprep.subr.bf16.mxu0 0
          %1354 = vmatpush1.bf16.msra.mxu0 %v1332
          %1355 = vmatprep.subr.bf16.mxu0 0
          %1356 = vmatpush1.bf16.msra.mxu0 %v1331
          %1357 = vmatprep.subr.bf16.mxu0 0
          %1358 = vmatpush1.bf16.msra.mxu0 %v1330
          %1359 = vmatprep.subr.bf16.mxu0 0
          %1360 = vmatpush1.bf16.msra.mxu0 %v1329
          %1361 = vmatprep.subr.bf16.mxu0 0
          %1362 = vmatpush2.bf16.msra.mxu0 0
          %1363 = vmatprep.subr.bf16.mxu0 0
          %1364 = vmatpush2.bf16.msra.mxu0 0
          %1365 = vmatprep.subr.bf16.mxu0 0
          %1366 = vmatpush2.bf16.msra.mxu0 0
          %1367 = vmatprep.subr.bf16.mxu0 0
          %1368 = vmatpush2.bf16.msra.mxu0 0
          %1369 = vmatprep.subr.bf16.mxu0 0
          %1370 = vmatpush2.bf16.msra.mxu0 0
          %1371 = vmatprep.subr.bf16.mxu0 0
          %1372 = vmatpush2.bf16.msra.mxu0 0
          %1373 = vmatprep.subr.bf16.mxu0 0
          %1374 = vmatpush2.bf16.msra.mxu0 0
          %1375 = vmatprep.subr.bf16.mxu0 0
          %1376 = vmatpush2.bf16.msra.mxu0 0
          %1377 = vmatprep.mubr.bf16.mxu0 0
          %1378 = vmatmul.mubr.bf16.gmra.mxu0 %v1276
          %v1379 = vpop.f32.mrf.mxu0
          %v1380 = vadd.f32 %v1296, %v1379
          %v1381 = vpop.f32.mrf.mxu0
          %v1382 = vpop.f32.mrf.mxu0
          %v1383 = vpop.f32.mrf.mxu0
          %1384 = vdwg.mxu0
          %v1385 = vadd.f32 %v1380, %v1275
          %1386 = vadd.xlane.f32.xlu0 %v1385
          %v1387 = vpop.xlane.xlu0 %1386
          %v1388 = vmul.f32 %v1387, 0.03125
          %v1389 = vmul.f32 %v1385, %v1385
          %1390 = vadd.xlane.f32.xlu0 %v1389
          %v1391 = vpop.xlane.xlu0 %1390
          %v1392 = vmul.f32 %v1391, 0.03125
          %v1393 = vmul.f32 %v1388, %v1388
          %v1394 = vsub.f32 %v1392, %v1393
          %v1395 = vsub.f32 %v1385, %v1388
          %v1396 = vadd.f32 %v1394, 1e-05
          %v1397 = vrsqrt.pop %v1396
          %v1398 = vmul.f32 %v1395, %v1397
          %v1399 = vmul.f32 %v1398, %v1269
          %v1400 = vadd.f32 %v1399, %v1274
          %v1401 = vpack.c.bf16 %v1400, %v1400
          %1402 = vst [vmem:[#allocation2] sm:$0xf] %v1401
        $region84: #{tpu_custom_call.1} parent=51 // pred_fallthru
          _
        %v1403 = vld [vmem:[#allocation2] sm:$0xf]
        %v1404 = vld [vmem:[%s406] sm:$0xf]
        %v1405 = vld [vmem:[%s406 + $0x4] sm:$0xf]
        %v1406 = vld [vmem:[%s406 + $0x8] sm:$0xf]
        %v1407 = vld [vmem:[%s406 + $0xc] sm:$0xf]
        %v1408 = vld [vmem:[%s406 + $0x10] sm:$0xf]
        %v1409 = vld [vmem:[%s406 + $0x14] sm:$0xf]
        %v1410 = vld [vmem:[%s406 + $0x18] sm:$0xf]
        %v1411 = vld [vmem:[%s406 + $0x1c] sm:$0xf]
        %v1412 = vld [vmem:[%s406 + $0x20] sm:$0xf]
        %v1413 = vld [vmem:[%s406 + $0x24] sm:$0xf]
        %v1414 = vld [vmem:[%s406 + $0x28] sm:$0xf]
        %v1415 = vld [vmem:[%s406 + $0x2c] sm:$0xf]
        %v1416 = vld [vmem:[%s406 + $0x30] sm:$0xf]
        %v1417 = vld [vmem:[%s406 + $0x34] sm:$0xf]
        %v1418 = vld [vmem:[%s406 + $0x38] sm:$0xf]
        %v1419 = vld [vmem:[%s406 + $0x3c] sm:$0xf]
        %v1436 = vunpack.c.l.b16 %v1404
        %v1437 = vunpack.c.l.b16 %v1405
        %v1438 = vunpack.c.l.b16 %v1406
        %v1439 = vunpack.c.l.b16 %v1407
        %v1440 = vunpack.c.l.b16 %v1408
        %v1441 = vunpack.c.l.b16 %v1409
        %v1442 = vunpack.c.l.b16 %v1410
        %v1443 = vunpack.c.l.b16 %v1411
        %v1444 = vunpack.c.l.b16 %v1412
        %v1445 = vunpack.c.l.b16 %v1413
        %v1446 = vunpack.c.l.b16 %v1414
        %v1447 = vunpack.c.l.b16 %v1415
        %v1448 = vunpack.c.l.b16 %v1416
        %v1449 = vunpack.c.l.b16 %v1417
        %v1450 = vunpack.c.l.b16 %v1418
        %v1451 = vunpack.c.l.b16 %v1419
        %v1452 = vpack.c.b16 %v1437, %v1436
        %v1453 = vpack.c.b16 %v1439, %v1438
        %v1454 = vpack.c.b16 %v1441, %v1440
        %v1455 = vpack.c.b16 %v1443, %v1442
        %v1456 = vpack.c.b16 %v1445, %v1444
        %v1457 = vpack.c.b16 %v1447, %v1446
        %v1458 = vpack.c.b16 %v1449, %v1448
        %v1459 = vpack.c.b16 %v1451, %v1450
        %1468 = vmatprep.subr.bf16.mxu0 0
        %1469 = vmatpush1.bf16.msra.mxu0 %v1459
        %1470 = vmatprep.subr.bf16.mxu0 0
        %1471 = vmatpush1.bf16.msra.mxu0 %v1458
        %1472 = vmatprep.subr.bf16.mxu0 0
        %1473 = vmatpush1.bf16.msra.mxu0 %v1457
        %1474 = vmatprep.subr.bf16.mxu0 0
        %1475 = vmatpush1.bf16.msra.mxu0 %v1456
        %1476 = vmatprep.subr.bf16.mxu0 0
        %1477 = vmatpush1.bf16.msra.mxu0 %v1455
        %1478 = vmatprep.subr.bf16.mxu0 0
        %1479 = vmatpush1.bf16.msra.mxu0 %v1454
        %1480 = vmatprep.subr.bf16.mxu0 0
        %1481 = vmatpush1.bf16.msra.mxu0 %v1453
        %1482 = vmatprep.subr.bf16.mxu0 0
        %1483 = vmatpush1.bf16.msra.mxu0 %v1452
        %1484 = vmatprep.subr.bf16.mxu0 0
        %1485 = vmatpush2.bf16.msra.mxu0 0
        %1486 = vmatprep.subr.bf16.mxu0 0
        %1487 = vmatpush2.bf16.msra.mxu0 0
        %1488 = vmatprep.subr.bf16.mxu0 0
        %1489 = vmatpush2.bf16.msra.mxu0 0
        %1490 = vmatprep.subr.bf16.mxu0 0
        %1491 = vmatpush2.bf16.msra.mxu0 0
        %1492 = vmatprep.subr.bf16.mxu0 0
        %1493 = vmatpush2.bf16.msra.mxu0 0
        %1494 = vmatprep.subr.bf16.mxu0 0
        %1495 = vmatpush2.bf16.msra.mxu0 0
        %1496 = vmatprep.subr.bf16.mxu0 0
        %1497 = vmatpush2.bf16.msra.mxu0 0
        %1498 = vmatprep.subr.bf16.mxu0 0
        %1499 = vmatpush2.bf16.msra.mxu0 0
        %1500 = vmatprep.mubr.bf16.mxu0 0
        %1501 = vmatmul.mubr.bf16.gmra.mxu0 %v1403
        %v1502 = vpop.f32.mrf.mxu0
        %v1503 = vadd.f32 0.0, %v1502
        %v1504 = vpop.f32.mrf.mxu0
        %v1505 = vpop.f32.mrf.mxu0
        %v1506 = vpop.f32.mrf.mxu0
        %1507 = vdwg.mxu0
        %1508 = vst [vmem:[%s443] sm:$0xff] %v1503
        %s1509 = sand.u32 %s228, 1
        %s1510 = scalar_lea.sflag [#allocation5], %s1509
        %s1511 = sand.u32 %s228, 1
        %s1512 = smul.addr %s1511, 8
        %s1513 = scalar_lea.vmem [#allocation15], %s1512
        // Predicated region
        $region85: #{tpu_custom_call.1} parent=51 // pred_check
          %p1514 = pneg %p238
        $region86: #{tpu_custom_call.1} parent=51 // pred_check_branch
          %1516 = sbr.rel (%p1514) target = $region88
        $region87: #{tpu_custom_call.1} parent=51 // pred_region
          %s1518 = ssub.s32 128, 128
          %1519 = vsyncadd %s1510, %s1518
          %s1520 = smul.addr %s32, 2
          %s1521 = sadd.s32 %s33, %s1520
          %s1522 = smul.addr %s1521, 128
          %s1523 = scalar_lea.hbm %s8, %s1522
          %s1525 = sshll.u32 %s1513, 4
          %s1526 = int_to_ptr.vmem [resolvable:$true] %s1525
          %1528 = dma.vmem_to_hbm [thread:$0]  %s1526, 128, %s1523, %s1510
        $region88: #{tpu_custom_call.1} parent=51 // pred_fallthru
          _
      $region52: #{tpu_custom_call.1} parent=5 // pred_fallthru
        _
      %p1529 = scmp.le.s32.totalorder 2, %s23
      // Predicated region
      $region89: #{tpu_custom_call.1} parent=5 // pred_check
        %p1530 = pneg %p1529
      $region90: #{tpu_custom_call.1} parent=5 // pred_check_branch
        %1532 = sbr.rel (%p1530) target = $region92
      $region91: #{tpu_custom_call.1} parent=5 // pred_region
        %s1533 = ssub.s32 %s23, 2
        // Predicated region
        $region93: #{tpu_custom_call.1} parent=91 // pred_check
          %p1534 = pneg %p244
        $region94: #{tpu_custom_call.1} parent=91 // pred_check_branch
          %1536 = sbr.rel (%p1534) target = $region96
        $region95: #{tpu_custom_call.1} parent=91 // pred_region
          %s1537 = sand.u32 %s229, 1
          %s1538 = scalar_lea.sflag [#allocation5], %s1537
          %s1539 = sand.u32 %s229, 1
          %s1540 = smul.addr %s1539, 8
          %s1541 = scalar_lea.vmem [#allocation15], %s1540
          %1542 = dma.done %s1538, 128
        $region96: #{tpu_custom_call.1} parent=91 // pred_fallthru
          _
      $region92: #{tpu_custom_call.1} parent=5 // pred_fallthru
        _
    $region6: #{tpu_custom_call.1} parent=1 // loop_footer
      %s27 = sadd.s32 1, %s23
    $region7: #{tpu_custom_call.1} parent=1 // loop_footer_branch
      %22 = sbr.rel target = $region3
    $region8: #{tpu_custom_call.1} parent=1 // loop_exit
      _
    %1543 = vsyncpa [#allocation4], 1
    %s1544 = scalar_lea.sflag [#allocation4], 1
    %1545 = vsyncpa %s1544, 1
    %1546 = vsyncpa [#allocation7], 1
    %1547 = vsyncpa [#allocation10], 1
    %1548 = vsyncpa [#allocation13], 1
    %1549 = vsyncpa [#allocation5], 1
    %s1550 = scalar_lea.sflag [#allocation5], 1
    %1551 = vsyncpa %s1550, 1

</llo_original>
